<compile_context>
chip_gen: v7x
topology: tpu7x:2x2x1
jax: 0.10.0
libtpu: 0.0.40
codegen_flags: <defaults>
</compile_context>

<pallas_src>
import functools

import jax
import jax.numpy as jnp
from jax.experimental import pallas as pl
from jax.experimental.pallas import tpu as pltpu


_N_OUT = 8          # rows of embed_out
_N_PAD = 128        # lane-dense padded output width


# ----------------------------------------------------------------------------
# Pallas kernel: fully fused MLP head (fc3 + embed_out pre-folded into w34/b34)
#   x:(tb,Kin) w1:(Kin,H) b1:(1,H) w2:(H,H) b2:(1,H) w34:(H,128) b34:(1,128)
#   -> o:(tb,128)   (only the first 8 lanes are meaningful)
# ----------------------------------------------------------------------------
def _classification_kernel(x_ref, w1_ref, b1_ref, w2_ref, b2_ref,
                           w34_ref, b34_ref, o_ref):
    h = jnp.dot(x_ref[...], w1_ref[...],
                preferred_element_type=jnp.float32) + b1_ref[...]
    h = jnp.maximum(h, 0.2 * h)          # LeakyReLU(0.2)
    # TODO(synk): train-mode Dropout(0.5) (stochastic mask via pltpu.prng_*) is
    # not implemented; the eval-mode forward (dropout == identity) is computed.

    h = jnp.dot(h, w2_ref[...],
                preferred_element_type=jnp.float32) + b2_ref[...]
    h = jnp.maximum(h, 0.2 * h)

    o = jnp.dot(h, w34_ref[...],
                preferred_element_type=jnp.float32) + b34_ref[...]
    o_ref[...] = o.astype(o_ref.dtype)


def _round_up(a, m):
    return (a + m - 1) // m * m


# ----------------------------------------------------------------------------
# One-time (outside the hot path) weight preparation:
#   - transpose PyTorch (out, in) weights to (in, out)
#   - fold fc3 and embed_out:  W34 = w3t @ emb^T,  b34 = b3 @ emb^T
#   - pad the fused out-dim 8 -> 128 for a lane-dense output store
# ----------------------------------------------------------------------------
def prepare_kernel_params(params):
    w1t = jnp.transpose(params["fc1"]["w"])                 # (Kin, H)
    b1 = params["fc1"]["b"].reshape(1, -1)                  # (1, H)
    w2t = jnp.transpose(params["fc2"]["w"])                 # (H, H)
    b2 = params["fc2"]["b"].reshape(1, -1)                  # (1, H)

    w3t = jnp.transpose(params["fc3"]["w"])                 # (H, F)
    b3 = params["fc3"]["b"].reshape(1, -1)                  # (1, F)
    embt = jnp.transpose(params["embed_out"])               # (F, 8)

    w34 = w3t @ embt                                        # (H, 8)
    b34 = b3 @ embt                                         # (1, 8)

    H = w34.shape[0]
    w34p = jnp.zeros((H, _N_PAD), w34.dtype).at[:, :_N_OUT].set(w34)
    b34p = jnp.zeros((1, _N_PAD), b34.dtype).at[:, :_N_OUT].set(b34)

    return {"w1t": w1t, "b1": b1, "w2t": w2t, "b2": b2,
            "w34p": w34p, "b34p": b34p}


@functools.partial(jax.jit, static_argnames=("batch_tile",))
def classification_forward(kparams, x, *, batch_tile=128):
    """x: (B, num_features[3] * 4^3) float32 -> (B, 8) float32."""
    B, Kin = x.shape
    w1t, b1 = kparams["w1t"], kparams["b1"]
    w2t, b2 = kparams["w2t"], kparams["b2"]
    w34p, b34p = kparams["w34p"], kparams["b34p"]
    H = w1t.shape[1]

    # Batch tiling: pad to a multiple of 8 sublanes; one "parallel" grid axis.
    tb = min(batch_tile, _round_up(B, 8))
    Bp = _round_up(B, tb)
    xp = jnp.pad(x, ((0, Bp - B), (0, 0))) if Bp != B else x

    # VMEM budget (double-buffered x / out tiles + resident weights).  Only
    # raise the scoped-VMEM limit when a large batch_tile actually needs it.
    vmem_need = 4 * (2 * tb * Kin + 2 * tb * _N_PAD
                     + 2 * (Kin * H + H * H + H * _N_PAD + 2 * H + _N_PAD))
    vmem_limit = None
    if vmem_need > 12 * 1024 * 1024:
        vmem_limit = min(int(vmem_need * 3 // 2) + (2 << 20), 48 * 1024 * 1024)

    flops = 2 * Bp * (Kin * H + H * H + H * _N_PAD)
    bytes_accessed = 4 * (Bp * Kin + Bp * _N_PAD
                          + Kin * H + H * H + H * _N_PAD + 2 * H + _N_PAD)

    out = pl.pallas_call(
        _classification_kernel,
        out_shape=jax.ShapeDtypeStruct((Bp, _N_PAD), x.dtype),
        grid=(Bp // tb,),
        in_specs=[
            pl.BlockSpec((tb, Kin), lambda i: (i, 0)),       # activations tile
            pl.BlockSpec((Kin, H), lambda i: (0, 0)),        # fc1 weight (resident)
            pl.BlockSpec((1, H), lambda i: (0, 0)),          # fc1 bias
            pl.BlockSpec((H, H), lambda i: (0, 0)),          # fc2 weight
            pl.BlockSpec((1, H), lambda i: (0, 0)),          # fc2 bias
            pl.BlockSpec((H, _N_PAD), lambda i: (0, 0)),     # fused fc3+embed_out (padded)
            pl.BlockSpec((1, _N_PAD), lambda i: (0, 0)),     # fused bias (padded)
        ],
        out_specs=pl.BlockSpec((tb, _N_PAD), lambda i: (i, 0)),
        compiler_params=pltpu.CompilerParams(
            dimension_semantics=("parallel",),
            vmem_limit_bytes=vmem_limit),
        cost_estimate=pl.CostEstimate(
            flops=flops, transcendentals=0, bytes_accessed=bytes_accessed),
    )(xp, w1t, b1, w2t, b2, w34p, b34p)

    return out[:B, :_N_OUT]


# ----------------------------------------------------------------------------
# Parameter construction (deterministic, matches Classification.__init__ shapes)
# ----------------------------------------------------------------------------
def init_params(key, num_features, mapping_fmaps):
    hid = num_features[3]
    kin = hid * 4 ** 3

    def linear(k, fan_in, fan_out):
        kw_, kb_ = jax.random.split(k)
        lim = 1.0 / (fan_in ** 0.5)
        w = jax.random.uniform(kw_, (fan_out, fan_in), jnp.float32, -lim, lim)
        b = jax.random.uniform(kb_, (fan_out,), jnp.float32, -lim, lim)
        return {"w": w, "b": b}

    k1, k2, k3, ke = jax.random.split(key, 4)
    return {
        "fc1": linear(k1, kin, hid),
        "fc2": linear(k2, hid, hid),
        "fc3": linear(k3, hid, mapping_fmaps),
        # nn.init.normal_(embed_out, mean=0, std=mapping_fmaps ** -0.5)
        "embed_out": jax.random.normal(ke, (_N_OUT, mapping_fmaps), jnp.float32)
                     * (mapping_fmaps ** -0.5),
    }


# ----------------------------------------------------------------------------
# Pure-JAX reference (eval mode) for the correctness check
# ----------------------------------------------------------------------------
def classification_forward_ref(params, x):
    def lrelu(v):
        return jnp.where(v > 0, v, 0.2 * v)

    h = lrelu(x @ params["fc1"]["w"].T + params["fc1"]["b"])
    h = lrelu(h @ params["fc2"]["w"].T + params["fc2"]["b"])
    h = h @ params["fc3"]["w"].T + params["fc3"]["b"]
    return h @ params["embed_out"].T


if __name__ == "__main__":
    key = jax.random.PRNGKey(0)
    k_param, k_x = jax.random.split(key)

    num_features = [8, 16, 32, 64]
    mapping_fmaps = 128
    batch = 2

    params = init_params(k_param, num_features, mapping_fmaps)
    # One-time weight layout prep (transpose + fc3/embed_out fold + lane pad),
    # kept OUT of the per-call hot path.
    kparams = jax.tree_util.tree_map(
        jax.block_until_ready, prepare_kernel_params(params))

    # Input of Classification.forward: flattened features, (B, num_features[3] * 4^3)
    x = jax.random.normal(
        k_x, (batch, num_features[3] * 4 ** 3), jnp.float32)

    out = jax.block_until_ready(classification_forward(kparams, x))
    assert out.shape == (batch, _N_OUT), out.shape

    ref = jax.block_until_ready(classification_forward_ref(params, x))
    assert jnp.allclose(out, ref, atol=1e-4, rtol=1e-4), \
        float(jnp.max(jnp.abs(out - ref)))

    print("KERNEL_OK")
</pallas_src>

<mosaic_0001>
module attributes {stable_mosaic.version = 11 : i64} {
  func.func @_classification_kernel(%arg0: i32, %arg1: memref<8x4096xf32, #tpu.memory_space<vmem>>, %arg2: memref<4096x64xf32, #tpu.memory_space<vmem>>, %arg3: memref<1x64xf32, #tpu.memory_space<vmem>>, %arg4: memref<64x64xf32, #tpu.memory_space<vmem>>, %arg5: memref<1x64xf32, #tpu.memory_space<vmem>>, %arg6: memref<64x128xf32, #tpu.memory_space<vmem>>, %arg7: memref<1x128xf32, #tpu.memory_space<vmem>>, %arg8: memref<8x128xf32, #tpu.memory_space<vmem>>) attributes {dimension_semantics = [#tpu.dimension_semantics<parallel>], iteration_bounds = array<i64: 1>, scalar_prefetch = 0 : i64, scratch_operands = 0 : i64, tpu.core_type = #tpu.core_type<tc>, window_params = [{transform_indices = @transform_0, window_bounds = array<i64: 8, 4096>}, {pipeline_mode = #tpu.pipeline_mode<synchronous>, transform_indices = @transform_1, window_bounds = array<i64: 4096, 64>}, {pipeline_mode = #tpu.pipeline_mode<synchronous>, transform_indices = @transform_2, window_bounds = array<i64: 1, 64>}, {pipeline_mode = #tpu.pipeline_mode<synchronous>, transform_indices = @transform_3, window_bounds = array<i64: 64, 64>}, {pipeline_mode = #tpu.pipeline_mode<synchronous>, transform_indices = @transform_4, window_bounds = array<i64: 1, 64>}, {pipeline_mode = #tpu.pipeline_mode<synchronous>, transform_indices = @transform_5, window_bounds = array<i64: 64, 128>}, {pipeline_mode = #tpu.pipeline_mode<synchronous>, transform_indices = @transform_6, window_bounds = array<i64: 1, 128>}, {transform_indices = @transform_7, window_bounds = array<i64: 8, 128>}]} {
    %c0 = arith.constant 0 : index
    %c0_0 = arith.constant 0 : index
    %0 = vector.load %arg1[%c0, %c0_0] : memref<8x4096xf32, #tpu.memory_space<vmem>>, vector<8x4096xf32>
    %c0_1 = arith.constant 0 : index
    %c0_2 = arith.constant 0 : index
    %1 = vector.load %arg2[%c0_1, %c0_2] : memref<4096x64xf32, #tpu.memory_space<vmem>>, vector<4096x64xf32>
    %cst = arith.constant dense<0.000000e+00> : vector<8x64xf32>
    %2 = tpu.matmul %0, %1, %cst {dimension_numbers = #tpu.dot_dimension_numbers<[1], [0], [0], [1], [0, 0, 1, 1], [], []>} : vector<8x4096xf32>, vector<4096x64xf32>, vector<8x64xf32> -> vector<8x64xf32>
    %c0_3 = arith.constant 0 : index
    %c0_4 = arith.constant 0 : index
    %3 = vector.load %arg3[%c0_3, %c0_4] : memref<1x64xf32, #tpu.memory_space<vmem>>, vector<1x64xf32>
    %4 = vector.broadcast %3 : vector<1x64xf32> to vector<8x64xf32>
    %5 = arith.addf %2, %4 : vector<8x64xf32>
    %cst_5 = arith.constant 2.000000e-01 : f32
    %6 = vector.broadcast %cst_5 : f32 to vector<8x64xf32>
    %7 = arith.mulf %6, %5 : vector<8x64xf32>
    %8 = arith.maximumf %5, %7 : vector<8x64xf32>
    %c0_6 = arith.constant 0 : index
    %c0_7 = arith.constant 0 : index
    %9 = vector.load %arg4[%c0_6, %c0_7] : memref<64x64xf32, #tpu.memory_space<vmem>>, vector<64x64xf32>
    %cst_8 = arith.constant dense<0.000000e+00> : vector<8x64xf32>
    %10 = tpu.matmul %8, %9, %cst_8 {dimension_numbers = #tpu.dot_dimension_numbers<[1], [0], [0], [1], [0, 0, 1, 1], [], []>} : vector<8x64xf32>, vector<64x64xf32>, vector<8x64xf32> -> vector<8x64xf32>
    %c0_9 = arith.constant 0 : index
    %c0_10 = arith.constant 0 : index
    %11 = vector.load %arg5[%c0_9, %c0_10] : memref<1x64xf32, #tpu.memory_space<vmem>>, vector<1x64xf32>
    %12 = vector.broadcast %11 : vector<1x64xf32> to vector<8x64xf32>
    %13 = arith.addf %10, %12 : vector<8x64xf32>
    %cst_11 = arith.constant 2.000000e-01 : f32
    %14 = vector.broadcast %cst_11 : f32 to vector<8x64xf32>
    %15 = arith.mulf %14, %13 : vector<8x64xf32>
    %16 = arith.maximumf %13, %15 : vector<8x64xf32>
    %c0_12 = arith.constant 0 : index
    %c0_13 = arith.constant 0 : index
    %17 = vector.load %arg6[%c0_12, %c0_13] : memref<64x128xf32, #tpu.memory_space<vmem>>, vector<64x128xf32>
    %cst_14 = arith.constant dense<0.000000e+00> : vector<8x128xf32>
    %18 = tpu.matmul %16, %17, %cst_14 {dimension_numbers = #tpu.dot_dimension_numbers<[1], [0], [0], [1], [0, 0, 1, 1], [], []>} : vector<8x64xf32>, vector<64x128xf32>, vector<8x128xf32> -> vector<8x128xf32>
    %c0_15 = arith.constant 0 : index
    %c0_16 = arith.constant 0 : index
    %19 = vector.load %arg7[%c0_15, %c0_16] : memref<1x128xf32, #tpu.memory_space<vmem>>, vector<1x128xf32>
    %20 = vector.broadcast %19 : vector<1x128xf32> to vector<8x128xf32>
    %21 = arith.addf %18, %20 : vector<8x128xf32>
    %c0_17 = arith.constant 0 : index
    %c0_18 = arith.constant 0 : index
    %22 = vector.load %arg8[%c0_17, %c0_18] : memref<8x128xf32, #tpu.memory_space<vmem>>, vector<8x128xf32>
    tpu.vector_store %arg8[%c0_17, %c0_18], %21 {strides = array<i32>} : memref<8x128xf32, #tpu.memory_space<vmem>>, vector<8x128xf32>,
    return
  }
  func.func @transform_0(%arg0: i32) -> (i32, i32) {
    %c0_i32 = arith.constant 0 : i32
    %c0_i32_0 = arith.constant 0 : i32
    return %arg0, %c0_i32 : i32, i32
  }
  func.func @transform_1(%arg0: i32) -> (i32, i32) {
    %c0_i32 = arith.constant 0 : i32
    %c0_i32_0 = arith.constant 0 : i32
    %c0_i32_1 = arith.constant 0 : i32
    return %c0_i32, %c0_i32_0 : i32, i32
  }
  func.func @transform_2(%arg0: i32) -> (i32, i32) {
    %c0_i32 = arith.constant 0 : i32
    %c0_i32_0 = arith.constant 0 : i32
    %c0_i32_1 = arith.constant 0 : i32
    return %c0_i32, %c0_i32_0 : i32, i32
  }
  func.func @transform_3(%arg0: i32) -> (i32, i32) {
    %c0_i32 = arith.constant 0 : i32
    %c0_i32_0 = arith.constant 0 : i32
    %c0_i32_1 = arith.constant 0 : i32
    return %c0_i32, %c0_i32_0 : i32, i32
  }
  func.func @transform_4(%arg0: i32) -> (i32, i32) {
    %c0_i32 = arith.constant 0 : i32
    %c0_i32_0 = arith.constant 0 : i32
    %c0_i32_1 = arith.constant 0 : i32
    return %c0_i32, %c0_i32_0 : i32, i32
  }
  func.func @transform_5(%arg0: i32) -> (i32, i32) {
    %c0_i32 = arith.constant 0 : i32
    %c0_i32_0 = arith.constant 0 : i32
    %c0_i32_1 = arith.constant 0 : i32
    return %c0_i32, %c0_i32_0 : i32, i32
  }
  func.func @transform_6(%arg0: i32) -> (i32, i32) {
    %c0_i32 = arith.constant 0 : i32
    %c0_i32_0 = arith.constant 0 : i32
    %c0_i32_1 = arith.constant 0 : i32
    return %c0_i32, %c0_i32_0 : i32, i32
  }
  func.func @transform_7(%arg0: i32) -> (i32, i32) {
    %c0_i32 = arith.constant 0 : i32
    %c0_i32_0 = arith.constant 0 : i32
    return %arg0, %c0_i32 : i32, i32
  }
}

</mosaic_0001>

<llo_original>
// kernel: classification_forward.1
$region0: #{classification_forward.1}
  #allocation0 [shape = 'u32[]', space=smem, size = 0x4, offset = 0x4, fixed_abs, tag = 'smem constant byte address 0x4 - core index']
  #allocation1 [shape = 'u32[144,128]{1,0:T(1,128)}', space=vmem, size = 0x12000, scoped, tag = 'internal scratch']
  %s0 = inlined_call_operand.vmem [shape: f32[8,4096], index: 0, kind: input, shape index: {}]
  %s1 = inlined_call_operand.vmem [shape: f32[4096,64], index: 1, kind: input, shape index: {}]
  %s2 = inlined_call_operand.vmem [shape: f32[1,64], index: 2, kind: input, shape index: {}]
  %s3 = inlined_call_operand.vmem [shape: f32[64,64], index: 3, kind: input, shape index: {}]
  %s4 = inlined_call_operand.vmem [shape: f32[1,64], index: 4, kind: input, shape index: {}]
  %s5 = inlined_call_operand.vmem [shape: f32[64,128], index: 5, kind: input, shape index: {}]
  %s6 = inlined_call_operand.vmem [shape: f32[1,128], index: 6, kind: input, shape index: {}]
  %s7 = inlined_call_operand.vmem [shape: f32[8,128], index: 7, kind: output, shape index: {}]
  %s8 = sld [smem:[#allocation0]]
  $region38: #{classification_forward.1} parent=0
    _
  %s10 = ssub.s32 1, %s8
  %s11 = scalar_select 0, %s10, %s8
  // Predicated region
  $region2: #{classification_forward.1} parent=0 // pred_check
    _
  $region3: #{classification_forward.1} parent=0 // pred_check_branch
    %13 = sbr.rel (0) target = $region5
  $region4: #{classification_forward.1} parent=0 // pred_region
    _
  $region5: #{classification_forward.1} parent=0 // pred_fallthru
    _
  // Predicated region
  $region6: #{classification_forward.1} parent=0 // pred_check
    _
  $region7: #{classification_forward.1} parent=0 // pred_check_branch
    %15 = sbr.rel (0) target = $region9
  $region8: #{classification_forward.1} parent=0 // pred_region
    _
  $region9: #{classification_forward.1} parent=0 // pred_fallthru
    _
  // Predicated region
  $region10: #{classification_forward.1} parent=0 // pred_check
    _
  $region11: #{classification_forward.1} parent=0 // pred_check_branch
    %17 = sbr.rel (0) target = $region13
  $region12: #{classification_forward.1} parent=0 // pred_region
    _
  $region13: #{classification_forward.1} parent=0 // pred_fallthru
    _
  // Predicated region
  $region14: #{classification_forward.1} parent=0 // pred_check
    _
  $region15: #{classification_forward.1} parent=0 // pred_check_branch
    %19 = sbr.rel (0) target = $region17
  $region16: #{classification_forward.1} parent=0 // pred_region
    _
  $region17: #{classification_forward.1} parent=0 // pred_fallthru
    _
  // Predicated region
  $region18: #{classification_forward.1} parent=0 // pred_check
    _
  $region19: #{classification_forward.1} parent=0 // pred_check_branch
    %21 = sbr.rel (0) target = $region21
  $region20: #{classification_forward.1} parent=0 // pred_region
    _
  $region21: #{classification_forward.1} parent=0 // pred_fallthru
    _
  // Predicated region
  $region22: #{classification_forward.1} parent=0 // pred_check
    _
  $region23: #{classification_forward.1} parent=0 // pred_check_branch
    %23 = sbr.rel (0) target = $region25
  $region24: #{classification_forward.1} parent=0 // pred_region
    _
  $region25: #{classification_forward.1} parent=0 // pred_fallthru
    _
  // Predicated region
  $region26: #{classification_forward.1} parent=0 // pred_check
    _
  $region27: #{classification_forward.1} parent=0 // pred_check_branch
    %25 = sbr.rel (0) target = $region29
  $region28: #{classification_forward.1} parent=0 // pred_region
    _
  $region29: #{classification_forward.1} parent=0 // pred_fallthru
    _
  %v26 = vld [vmem:[%s0] sm:$0xff]
  %v27 = vld [vmem:[%s0 + $0x8] sm:$0xff]
  %v28 = vld [vmem:[%s0 + $0x10] sm:$0xff]
  %v29 = vld [vmem:[%s0 + $0x18] sm:$0xff]
  %v30 = vld [vmem:[%s0 + $0x20] sm:$0xff]
  %v31 = vld [vmem:[%s0 + $0x28] sm:$0xff]
  %v32 = vld [vmem:[%s0 + $0x30] sm:$0xff]
  %v33 = vld [vmem:[%s0 + $0x38] sm:$0xff]
  %v34 = vld [vmem:[%s0 + $0x40] sm:$0xff]
  %v35 = vld [vmem:[%s0 + $0x48] sm:$0xff]
  %v36 = vld [vmem:[%s0 + $0x50] sm:$0xff]
  %v37 = vld [vmem:[%s0 + $0x58] sm:$0xff]
  %v38 = vld [vmem:[%s0 + $0x60] sm:$0xff]
  %v39 = vld [vmem:[%s0 + $0x68] sm:$0xff]
  %v40 = vld [vmem:[%s0 + $0x70] sm:$0xff]
  %v41 = vld [vmem:[%s0 + $0x78] sm:$0xff]
  %v42 = vld [vmem:[%s0 + $0x80] sm:$0xff]
  %v43 = vld [vmem:[%s0 + $0x88] sm:$0xff]
  %v44 = vld [vmem:[%s0 + $0x90] sm:$0xff]
  %v45 = vld [vmem:[%s0 + $0x98] sm:$0xff]
  %v46 = vld [vmem:[%s0 + $0xa0] sm:$0xff]
  %v47 = vld [vmem:[%s0 + $0xa8] sm:$0xff]
  %v48 = vld [vmem:[%s0 + $0xb0] sm:$0xff]
  %v49 = vld [vmem:[%s0 + $0xb8] sm:$0xff]
  %v50 = vld [vmem:[%s0 + $0xc0] sm:$0xff]
  %v51 = vld [vmem:[%s0 + $0xc8] sm:$0xff]
  %v52 = vld [vmem:[%s0 + $0xd0] sm:$0xff]
  %v53 = vld [vmem:[%s0 + $0xd8] sm:$0xff]
  %v54 = vld [vmem:[%s0 + $0xe0] sm:$0xff]
  %v55 = vld [vmem:[%s0 + $0xe8] sm:$0xff]
  %v56 = vld [vmem:[%s0 + $0xf0] sm:$0xff]
  %v57 = vld [vmem:[%s0 + $0xf8] sm:$0xff]
  %v58 = vld [vmem:[%s1] sm:$0xff]
  %v59 = vld [vmem:[%s1 + $0x8] sm:$0xff]
  %v60 = vld [vmem:[%s1 + $0x10] sm:$0xff]
  %v61 = vld [vmem:[%s1 + $0x18] sm:$0xff]
  %v62 = vld [vmem:[%s1 + $0x20] sm:$0xff]
  %v63 = vld [vmem:[%s1 + $0x28] sm:$0xff]
  %v64 = vld [vmem:[%s1 + $0x30] sm:$0xff]
  %v65 = vld [vmem:[%s1 + $0x38] sm:$0xff]
  %v66 = vld [vmem:[%s1 + $0x40] sm:$0xff]
  %v67 = vld [vmem:[%s1 + $0x48] sm:$0xff]
  %v68 = vld [vmem:[%s1 + $0x50] sm:$0xff]
  %v69 = vld [vmem:[%s1 + $0x58] sm:$0xff]
  %v70 = vld [vmem:[%s1 + $0x60] sm:$0xff]
  %v71 = vld [vmem:[%s1 + $0x68] sm:$0xff]
  %v72 = vld [vmem:[%s1 + $0x70] sm:$0xff]
  %v73 = vld [vmem:[%s1 + $0x78] sm:$0xff]
  %v74 = vld [vmem:[%s1 + $0x80] sm:$0xff]
  %v75 = vld [vmem:[%s1 + $0x88] sm:$0xff]
  %v76 = vld [vmem:[%s1 + $0x90] sm:$0xff]
  %v77 = vld [vmem:[%s1 + $0x98] sm:$0xff]
  %v78 = vld [vmem:[%s1 + $0xa0] sm:$0xff]
  %v79 = vld [vmem:[%s1 + $0xa8] sm:$0xff]
  %v80 = vld [vmem:[%s1 + $0xb0] sm:$0xff]
  %v81 = vld [vmem:[%s1 + $0xb8] sm:$0xff]
  %v82 = vld [vmem:[%s1 + $0xc0] sm:$0xff]
  %v83 = vld [vmem:[%s1 + $0xc8] sm:$0xff]
  %v84 = vld [vmem:[%s1 + $0xd0] sm:$0xff]
  %v85 = vld [vmem:[%s1 + $0xd8] sm:$0xff]
  %v86 = vld [vmem:[%s1 + $0xe0] sm:$0xff]
  %v87 = vld [vmem:[%s1 + $0xe8] sm:$0xff]
  %v88 = vld [vmem:[%s1 + $0xf0] sm:$0xff]
  %v89 = vld [vmem:[%s1 + $0xf8] sm:$0xff]
  %v90 = vld [vmem:[%s1 + $0x100] sm:$0xff]
  %v91 = vld [vmem:[%s1 + $0x108] sm:$0xff]
  %v92 = vld [vmem:[%s1 + $0x110] sm:$0xff]
  %v93 = vld [vmem:[%s1 + $0x118] sm:$0xff]
  %v94 = vld [vmem:[%s1 + $0x120] sm:$0xff]
  %v95 = vld [vmem:[%s1 + $0x128] sm:$0xff]
  %v96 = vld [vmem:[%s1 + $0x130] sm:$0xff]
  %v97 = vld [vmem:[%s1 + $0x138] sm:$0xff]
  %v98 = vld [vmem:[%s1 + $0x140] sm:$0xff]
  %v99 = vld [vmem:[%s1 + $0x148] sm:$0xff]
  %v100 = vld [vmem:[%s1 + $0x150] sm:$0xff]
  %v101 = vld [vmem:[%s1 + $0x158] sm:$0xff]
  %v102 = vld [vmem:[%s1 + $0x160] sm:$0xff]
  %v103 = vld [vmem:[%s1 + $0x168] sm:$0xff]
  %v104 = vld [vmem:[%s1 + $0x170] sm:$0xff]
  %v105 = vld [vmem:[%s1 + $0x178] sm:$0xff]
  %v106 = vld [vmem:[%s1 + $0x180] sm:$0xff]
  %v107 = vld [vmem:[%s1 + $0x188] sm:$0xff]
  %v108 = vld [vmem:[%s1 + $0x190] sm:$0xff]
  %v109 = vld [vmem:[%s1 + $0x198] sm:$0xff]
  %v110 = vld [vmem:[%s1 + $0x1a0] sm:$0xff]
  %v111 = vld [vmem:[%s1 + $0x1a8] sm:$0xff]
  %v112 = vld [vmem:[%s1 + $0x1b0] sm:$0xff]
  %v113 = vld [vmem:[%s1 + $0x1b8] sm:$0xff]
  %v114 = vld [vmem:[%s1 + $0x1c0] sm:$0xff]
  %v115 = vld [vmem:[%s1 + $0x1c8] sm:$0xff]
  %v116 = vld [vmem:[%s1 + $0x1d0] sm:$0xff]
  %v117 = vld [vmem:[%s1 + $0x1d8] sm:$0xff]
  %v118 = vld [vmem:[%s1 + $0x1e0] sm:$0xff]
  %v119 = vld [vmem:[%s1 + $0x1e8] sm:$0xff]
  %v120 = vld [vmem:[%s1 + $0x1f0] sm:$0xff]
  %v121 = vld [vmem:[%s1 + $0x1f8] sm:$0xff]
  %v122 = vld [vmem:[%s1 + $0x200] sm:$0xff]
  %v123 = vld [vmem:[%s1 + $0x208] sm:$0xff]
  %v124 = vld [vmem:[%s1 + $0x210] sm:$0xff]
  %v125 = vld [vmem:[%s1 + $0x218] sm:$0xff]
  %v126 = vld [vmem:[%s1 + $0x220] sm:$0xff]
  %v127 = vld [vmem:[%s1 + $0x228] sm:$0xff]
  %v128 = vld [vmem:[%s1 + $0x230] sm:$0xff]
  %v129 = vld [vmem:[%s1 + $0x238] sm:$0xff]
  %v130 = vld [vmem:[%s1 + $0x240] sm:$0xff]
  %v131 = vld [vmem:[%s1 + $0x248] sm:$0xff]
  %v132 = vld [vmem:[%s1 + $0x250] sm:$0xff]
  %v133 = vld [vmem:[%s1 + $0x258] sm:$0xff]
  %v134 = vld [vmem:[%s1 + $0x260] sm:$0xff]
  %v135 = vld [vmem:[%s1 + $0x268] sm:$0xff]
  %v136 = vld [vmem:[%s1 + $0x270] sm:$0xff]
  %v137 = vld [vmem:[%s1 + $0x278] sm:$0xff]
  %v138 = vld [vmem:[%s1 + $0x280] sm:$0xff]
  %v139 = vld [vmem:[%s1 + $0x288] sm:$0xff]
  %v140 = vld [vmem:[%s1 + $0x290] sm:$0xff]
  %v141 = vld [vmem:[%s1 + $0x298] sm:$0xff]
  %v142 = vld [vmem:[%s1 + $0x2a0] sm:$0xff]
  %v143 = vld [vmem:[%s1 + $0x2a8] sm:$0xff]
  %v144 = vld [vmem:[%s1 + $0x2b0] sm:$0xff]
  %v145 = vld [vmem:[%s1 + $0x2b8] sm:$0xff]
  %v146 = vld [vmem:[%s1 + $0x2c0] sm:$0xff]
  %v147 = vld [vmem:[%s1 + $0x2c8] sm:$0xff]
  %v148 = vld [vmem:[%s1 + $0x2d0] sm:$0xff]
  %v149 = vld [vmem:[%s1 + $0x2d8] sm:$0xff]
  %v150 = vld [vmem:[%s1 + $0x2e0] sm:$0xff]
  %v151 = vld [vmem:[%s1 + $0x2e8] sm:$0xff]
  %v152 = vld [vmem:[%s1 + $0x2f0] sm:$0xff]
  %v153 = vld [vmem:[%s1 + $0x2f8] sm:$0xff]
  %v154 = vld [vmem:[%s1 + $0x300] sm:$0xff]
  %v155 = vld [vmem:[%s1 + $0x308] sm:$0xff]
  %v156 = vld [vmem:[%s1 + $0x310] sm:$0xff]
  %v157 = vld [vmem:[%s1 + $0x318] sm:$0xff]
  %v158 = vld [vmem:[%s1 + $0x320] sm:$0xff]
  %v159 = vld [vmem:[%s1 + $0x328] sm:$0xff]
  %v160 = vld [vmem:[%s1 + $0x330] sm:$0xff]
  %v161 = vld [vmem:[%s1 + $0x338] sm:$0xff]
  %v162 = vld [vmem:[%s1 + $0x340] sm:$0xff]
  %v163 = vld [vmem:[%s1 + $0x348] sm:$0xff]
  %v164 = vld [vmem:[%s1 + $0x350] sm:$0xff]
  %v165 = vld [vmem:[%s1 + $0x358] sm:$0xff]
  %v166 = vld [vmem:[%s1 + $0x360] sm:$0xff]
  %v167 = vld [vmem:[%s1 + $0x368] sm:$0xff]
  %v168 = vld [vmem:[%s1 + $0x370] sm:$0xff]
  %v169 = vld [vmem:[%s1 + $0x378] sm:$0xff]
  %v170 = vld [vmem:[%s1 + $0x380] sm:$0xff]
  %v171 = vld [vmem:[%s1 + $0x388] sm:$0xff]
  %v172 = vld [vmem:[%s1 + $0x390] sm:$0xff]
  %v173 = vld [vmem:[%s1 + $0x398] sm:$0xff]
  %v174 = vld [vmem:[%s1 + $0x3a0] sm:$0xff]
  %v175 = vld [vmem:[%s1 + $0x3a8] sm:$0xff]
  %v176 = vld [vmem:[%s1 + $0x3b0] sm:$0xff]
  %v177 = vld [vmem:[%s1 + $0x3b8] sm:$0xff]
  %v178 = vld [vmem:[%s1 + $0x3c0] sm:$0xff]
  %v179 = vld [vmem:[%s1 + $0x3c8] sm:$0xff]
  %v180 = vld [vmem:[%s1 + $0x3d0] sm:$0xff]
  %v181 = vld [vmem:[%s1 + $0x3d8] sm:$0xff]
  %v182 = vld [vmem:[%s1 + $0x3e0] sm:$0xff]
  %v183 = vld [vmem:[%s1 + $0x3e8] sm:$0xff]
  %v184 = vld [vmem:[%s1 + $0x3f0] sm:$0xff]
  %v185 = vld [vmem:[%s1 + $0x3f8] sm:$0xff]
  %v186 = vld [vmem:[%s1 + $0x400] sm:$0xff]
  %v187 = vld [vmem:[%s1 + $0x408] sm:$0xff]
  %v188 = vld [vmem:[%s1 + $0x410] sm:$0xff]
  %v189 = vld [vmem:[%s1 + $0x418] sm:$0xff]
  %v190 = vld [vmem:[%s1 + $0x420] sm:$0xff]
  %v191 = vld [vmem:[%s1 + $0x428] sm:$0xff]
  %v192 = vld [vmem:[%s1 + $0x430] sm:$0xff]
  %v193 = vld [vmem:[%s1 + $0x438] sm:$0xff]
  %v194 = vld [vmem:[%s1 + $0x440] sm:$0xff]
  %v195 = vld [vmem:[%s1 + $0x448] sm:$0xff]
  %v196 = vld [vmem:[%s1 + $0x450] sm:$0xff]
  %v197 = vld [vmem:[%s1 + $0x458] sm:$0xff]
  %v198 = vld [vmem:[%s1 + $0x460] sm:$0xff]
  %v199 = vld [vmem:[%s1 + $0x468] sm:$0xff]
  %v200 = vld [vmem:[%s1 + $0x470] sm:$0xff]
  %v201 = vld [vmem:[%s1 + $0x478] sm:$0xff]
  %v202 = vld [vmem:[%s1 + $0x480] sm:$0xff]
  %v203 = vld [vmem:[%s1 + $0x488] sm:$0xff]
  %v204 = vld [vmem:[%s1 + $0x490] sm:$0xff]
  %v205 = vld [vmem:[%s1 + $0x498] sm:$0xff]
  %v206 = vld [vmem:[%s1 + $0x4a0] sm:$0xff]
  %v207 = vld [vmem:[%s1 + $0x4a8] sm:$0xff]
  %v208 = vld [vmem:[%s1 + $0x4b0] sm:$0xff]
  %v209 = vld [vmem:[%s1 + $0x4b8] sm:$0xff]
  %v210 = vld [vmem:[%s1 + $0x4c0] sm:$0xff]
  %v211 = vld [vmem:[%s1 + $0x4c8] sm:$0xff]
  %v212 = vld [vmem:[%s1 + $0x4d0] sm:$0xff]
  %v213 = vld [vmem:[%s1 + $0x4d8] sm:$0xff]
  %v214 = vld [vmem:[%s1 + $0x4e0] sm:$0xff]
  %v215 = vld [vmem:[%s1 + $0x4e8] sm:$0xff]
  %v216 = vld [vmem:[%s1 + $0x4f0] sm:$0xff]
  %v217 = vld [vmem:[%s1 + $0x4f8] sm:$0xff]
  %v218 = vld [vmem:[%s1 + $0x500] sm:$0xff]
  %v219 = vld [vmem:[%s1 + $0x508] sm:$0xff]
  %v220 = vld [vmem:[%s1 + $0x510] sm:$0xff]
  %v221 = vld [vmem:[%s1 + $0x518] sm:$0xff]
  %v222 = vld [vmem:[%s1 + $0x520] sm:$0xff]
  %v223 = vld [vmem:[%s1 + $0x528] sm:$0xff]
  %v224 = vld [vmem:[%s1 + $0x530] sm:$0xff]
  %v225 = vld [vmem:[%s1 + $0x538] sm:$0xff]
  %v226 = vld [vmem:[%s1 + $0x540] sm:$0xff]
  %v227 = vld [vmem:[%s1 + $0x548] sm:$0xff]
  %v228 = vld [vmem:[%s1 + $0x550] sm:$0xff]
  %v229 = vld [vmem:[%s1 + $0x558] sm:$0xff]
  %v230 = vld [vmem:[%s1 + $0x560] sm:$0xff]
  %v231 = vld [vmem:[%s1 + $0x568] sm:$0xff]
  %v232 = vld [vmem:[%s1 + $0x570] sm:$0xff]
  %v233 = vld [vmem:[%s1 + $0x578] sm:$0xff]
  %v234 = vld [vmem:[%s1 + $0x580] sm:$0xff]
  %v235 = vld [vmem:[%s1 + $0x588] sm:$0xff]
  %v236 = vld [vmem:[%s1 + $0x590] sm:$0xff]
  %v237 = vld [vmem:[%s1 + $0x598] sm:$0xff]
  %v238 = vld [vmem:[%s1 + $0x5a0] sm:$0xff]
  %v239 = vld [vmem:[%s1 + $0x5a8] sm:$0xff]
  %v240 = vld [vmem:[%s1 + $0x5b0] sm:$0xff]
  %v241 = vld [vmem:[%s1 + $0x5b8] sm:$0xff]
  %v242 = vld [vmem:[%s1 + $0x5c0] sm:$0xff]
  %v243 = vld [vmem:[%s1 + $0x5c8] sm:$0xff]
  %v244 = vld [vmem:[%s1 + $0x5d0] sm:$0xff]
  %v245 = vld [vmem:[%s1 + $0x5d8] sm:$0xff]
  %v246 = vld [vmem:[%s1 + $0x5e0] sm:$0xff]
  %v247 = vld [vmem:[%s1 + $0x5e8] sm:$0xff]
  %v248 = vld [vmem:[%s1 + $0x5f0] sm:$0xff]
  %v249 = vld [vmem:[%s1 + $0x5f8] sm:$0xff]
  %v250 = vld [vmem:[%s1 + $0x600] sm:$0xff]
  %v251 = vld [vmem:[%s1 + $0x608] sm:$0xff]
  %v252 = vld [vmem:[%s1 + $0x610] sm:$0xff]
  %v253 = vld [vmem:[%s1 + $0x618] sm:$0xff]
  %v254 = vld [vmem:[%s1 + $0x620] sm:$0xff]
  %v255 = vld [vmem:[%s1 + $0x628] sm:$0xff]
  %v256 = vld [vmem:[%s1 + $0x630] sm:$0xff]
  %v257 = vld [vmem:[%s1 + $0x638] sm:$0xff]
  %v258 = vld [vmem:[%s1 + $0x640] sm:$0xff]
  %v259 = vld [vmem:[%s1 + $0x648] sm:$0xff]
  %v260 = vld [vmem:[%s1 + $0x650] sm:$0xff]
  %v261 = vld [vmem:[%s1 + $0x658] sm:$0xff]
  %v262 = vld [vmem:[%s1 + $0x660] sm:$0xff]
  %v263 = vld [vmem:[%s1 + $0x668] sm:$0xff]
  %v264 = vld [vmem:[%s1 + $0x670] sm:$0xff]
  %v265 = vld [vmem:[%s1 + $0x678] sm:$0xff]
  %v266 = vld [vmem:[%s1 + $0x680] sm:$0xff]
  %v267 = vld [vmem:[%s1 + $0x688] sm:$0xff]
  %v268 = vld [vmem:[%s1 + $0x690] sm:$0xff]
  %v269 = vld [vmem:[%s1 + $0x698] sm:$0xff]
  %v270 = vld [vmem:[%s1 + $0x6a0] sm:$0xff]
  %v271 = vld [vmem:[%s1 + $0x6a8] sm:$0xff]
  %v272 = vld [vmem:[%s1 + $0x6b0] sm:$0xff]
  %v273 = vld [vmem:[%s1 + $0x6b8] sm:$0xff]
  %v274 = vld [vmem:[%s1 + $0x6c0] sm:$0xff]
  %v275 = vld [vmem:[%s1 + $0x6c8] sm:$0xff]
  %v276 = vld [vmem:[%s1 + $0x6d0] sm:$0xff]
  %v277 = vld [vmem:[%s1 + $0x6d8] sm:$0xff]
  %v278 = vld [vmem:[%s1 + $0x6e0] sm:$0xff]
  %v279 = vld [vmem:[%s1 + $0x6e8] sm:$0xff]
  %v280 = vld [vmem:[%s1 + $0x6f0] sm:$0xff]
  %v281 = vld [vmem:[%s1 + $0x6f8] sm:$0xff]
  %v282 = vld [vmem:[%s1 + $0x700] sm:$0xff]
  %v283 = vld [vmem:[%s1 + $0x708] sm:$0xff]
  %v284 = vld [vmem:[%s1 + $0x710] sm:$0xff]
  %v285 = vld [vmem:[%s1 + $0x718] sm:$0xff]
  %v286 = vld [vmem:[%s1 + $0x720] sm:$0xff]
  %v287 = vld [vmem:[%s1 + $0x728] sm:$0xff]
  %v288 = vld [vmem:[%s1 + $0x730] sm:$0xff]
  %v289 = vld [vmem:[%s1 + $0x738] sm:$0xff]
  %v290 = vld [vmem:[%s1 + $0x740] sm:$0xff]
  %v291 = vld [vmem:[%s1 + $0x748] sm:$0xff]
  %v292 = vld [vmem:[%s1 + $0x750] sm:$0xff]
  %v293 = vld [vmem:[%s1 + $0x758] sm:$0xff]
  %v294 = vld [vmem:[%s1 + $0x760] sm:$0xff]
  %v295 = vld [vmem:[%s1 + $0x768] sm:$0xff]
  %v296 = vld [vmem:[%s1 + $0x770] sm:$0xff]
  %v297 = vld [vmem:[%s1 + $0x778] sm:$0xff]
  %v298 = vld [vmem:[%s1 + $0x780] sm:$0xff]
  %v299 = vld [vmem:[%s1 + $0x788] sm:$0xff]
  %v300 = vld [vmem:[%s1 + $0x790] sm:$0xff]
  %v301 = vld [vmem:[%s1 + $0x798] sm:$0xff]
  %v302 = vld [vmem:[%s1 + $0x7a0] sm:$0xff]
  %v303 = vld [vmem:[%s1 + $0x7a8] sm:$0xff]
  %v304 = vld [vmem:[%s1 + $0x7b0] sm:$0xff]
  %v305 = vld [vmem:[%s1 + $0x7b8] sm:$0xff]
  %v306 = vld [vmem:[%s1 + $0x7c0] sm:$0xff]
  %v307 = vld [vmem:[%s1 + $0x7c8] sm:$0xff]
  %v308 = vld [vmem:[%s1 + $0x7d0] sm:$0xff]
  %v309 = vld [vmem:[%s1 + $0x7d8] sm:$0xff]
  %v310 = vld [vmem:[%s1 + $0x7e0] sm:$0xff]
  %v311 = vld [vmem:[%s1 + $0x7e8] sm:$0xff]
  %v312 = vld [vmem:[%s1 + $0x7f0] sm:$0xff]
  %v313 = vld [vmem:[%s1 + $0x7f8] sm:$0xff]
  %v314 = vld [vmem:[%s1 + $0x800] sm:$0xff]
  %v315 = vld [vmem:[%s1 + $0x808] sm:$0xff]
  %v316 = vld [vmem:[%s1 + $0x810] sm:$0xff]
  %v317 = vld [vmem:[%s1 + $0x818] sm:$0xff]
  %v318 = vld [vmem:[%s1 + $0x820] sm:$0xff]
  %v319 = vld [vmem:[%s1 + $0x828] sm:$0xff]
  %v320 = vld [vmem:[%s1 + $0x830] sm:$0xff]
  %v321 = vld [vmem:[%s1 + $0x838] sm:$0xff]
  %v322 = vld [vmem:[%s1 + $0x840] sm:$0xff]
  %v323 = vld [vmem:[%s1 + $0x848] sm:$0xff]
  %v324 = vld [vmem:[%s1 + $0x850] sm:$0xff]
  %v325 = vld [vmem:[%s1 + $0x858] sm:$0xff]
  %v326 = vld [vmem:[%s1 + $0x860] sm:$0xff]
  %v327 = vld [vmem:[%s1 + $0x868] sm:$0xff]
  %v328 = vld [vmem:[%s1 + $0x870] sm:$0xff]
  %v329 = vld [vmem:[%s1 + $0x878] sm:$0xff]
  %v330 = vld [vmem:[%s1 + $0x880] sm:$0xff]
  %v331 = vld [vmem:[%s1 + $0x888] sm:$0xff]
  %v332 = vld [vmem:[%s1 + $0x890] sm:$0xff]
  %v333 = vld [vmem:[%s1 + $0x898] sm:$0xff]
  %v334 = vld [vmem:[%s1 + $0x8a0] sm:$0xff]
  %v335 = vld [vmem:[%s1 + $0x8a8] sm:$0xff]
  %v336 = vld [vmem:[%s1 + $0x8b0] sm:$0xff]
  %v337 = vld [vmem:[%s1 + $0x8b8] sm:$0xff]
  %v338 = vld [vmem:[%s1 + $0x8c0] sm:$0xff]
  %v339 = vld [vmem:[%s1 + $0x8c8] sm:$0xff]
  %v340 = vld [vmem:[%s1 + $0x8d0] sm:$0xff]
  %v341 = vld [vmem:[%s1 + $0x8d8] sm:$0xff]
  %v342 = vld [vmem:[%s1 + $0x8e0] sm:$0xff]
  %v343 = vld [vmem:[%s1 + $0x8e8] sm:$0xff]
  %v344 = vld [vmem:[%s1 + $0x8f0] sm:$0xff]
  %v345 = vld [vmem:[%s1 + $0x8f8] sm:$0xff]
  %v346 = vld [vmem:[%s1 + $0x900] sm:$0xff]
  %v347 = vld [vmem:[%s1 + $0x908] sm:$0xff]
  %v348 = vld [vmem:[%s1 + $0x910] sm:$0xff]
  %v349 = vld [vmem:[%s1 + $0x918] sm:$0xff]
  %v350 = vld [vmem:[%s1 + $0x920] sm:$0xff]
  %v351 = vld [vmem:[%s1 + $0x928] sm:$0xff]
  %v352 = vld [vmem:[%s1 + $0x930] sm:$0xff]
  %v353 = vld [vmem:[%s1 + $0x938] sm:$0xff]
  %v354 = vld [vmem:[%s1 + $0x940] sm:$0xff]
  %v355 = vld [vmem:[%s1 + $0x948] sm:$0xff]
  %v356 = vld [vmem:[%s1 + $0x950] sm:$0xff]
  %v357 = vld [vmem:[%s1 + $0x958] sm:$0xff]
  %v358 = vld [vmem:[%s1 + $0x960] sm:$0xff]
  %v359 = vld [vmem:[%s1 + $0x968] sm:$0xff]
  %v360 = vld [vmem:[%s1 + $0x970] sm:$0xff]
  %v361 = vld [vmem:[%s1 + $0x978] sm:$0xff]
  %v362 = vld [vmem:[%s1 + $0x980] sm:$0xff]
  %v363 = vld [vmem:[%s1 + $0x988] sm:$0xff]
  %v364 = vld [vmem:[%s1 + $0x990] sm:$0xff]
  %v365 = vld [vmem:[%s1 + $0x998] sm:$0xff]
  %v366 = vld [vmem:[%s1 + $0x9a0] sm:$0xff]
  %v367 = vld [vmem:[%s1 + $0x9a8] sm:$0xff]
  %v368 = vld [vmem:[%s1 + $0x9b0] sm:$0xff]
  %v369 = vld [vmem:[%s1 + $0x9b8] sm:$0xff]
  %v370 = vld [vmem:[%s1 + $0x9c0] sm:$0xff]
  %v371 = vld [vmem:[%s1 + $0x9c8] sm:$0xff]
  %v372 = vld [vmem:[%s1 + $0x9d0] sm:$0xff]
  %v373 = vld [vmem:[%s1 + $0x9d8] sm:$0xff]
  %v374 = vld [vmem:[%s1 + $0x9e0] sm:$0xff]
  %v375 = vld [vmem:[%s1 + $0x9e8] sm:$0xff]
  %v376 = vld [vmem:[%s1 + $0x9f0] sm:$0xff]
  %v377 = vld [vmem:[%s1 + $0x9f8] sm:$0xff]
  %v378 = vld [vmem:[%s1 + $0xa00] sm:$0xff]
  %v379 = vld [vmem:[%s1 + $0xa08] sm:$0xff]
  %v380 = vld [vmem:[%s1 + $0xa10] sm:$0xff]
  %v381 = vld [vmem:[%s1 + $0xa18] sm:$0xff]
  %v382 = vld [vmem:[%s1 + $0xa20] sm:$0xff]
  %v383 = vld [vmem:[%s1 + $0xa28] sm:$0xff]
  %v384 = vld [vmem:[%s1 + $0xa30] sm:$0xff]
  %v385 = vld [vmem:[%s1 + $0xa38] sm:$0xff]
  %v386 = vld [vmem:[%s1 + $0xa40] sm:$0xff]
  %v387 = vld [vmem:[%s1 + $0xa48] sm:$0xff]
  %v388 = vld [vmem:[%s1 + $0xa50] sm:$0xff]
  %v389 = vld [vmem:[%s1 + $0xa58] sm:$0xff]
  %v390 = vld [vmem:[%s1 + $0xa60] sm:$0xff]
  %v391 = vld [vmem:[%s1 + $0xa68] sm:$0xff]
  %v392 = vld [vmem:[%s1 + $0xa70] sm:$0xff]
  %v393 = vld [vmem:[%s1 + $0xa78] sm:$0xff]
  %v394 = vld [vmem:[%s1 + $0xa80] sm:$0xff]
  %v395 = vld [vmem:[%s1 + $0xa88] sm:$0xff]
  %v396 = vld [vmem:[%s1 + $0xa90] sm:$0xff]
  %v397 = vld [vmem:[%s1 + $0xa98] sm:$0xff]
  %v398 = vld [vmem:[%s1 + $0xaa0] sm:$0xff]
  %v399 = vld [vmem:[%s1 + $0xaa8] sm:$0xff]
  %v400 = vld [vmem:[%s1 + $0xab0] sm:$0xff]
  %v401 = vld [vmem:[%s1 + $0xab8] sm:$0xff]
  %v402 = vld [vmem:[%s1 + $0xac0] sm:$0xff]
  %v403 = vld [vmem:[%s1 + $0xac8] sm:$0xff]
  %v404 = vld [vmem:[%s1 + $0xad0] sm:$0xff]
  %v405 = vld [vmem:[%s1 + $0xad8] sm:$0xff]
  %v406 = vld [vmem:[%s1 + $0xae0] sm:$0xff]
  %v407 = vld [vmem:[%s1 + $0xae8] sm:$0xff]
  %v408 = vld [vmem:[%s1 + $0xaf0] sm:$0xff]
  %v409 = vld [vmem:[%s1 + $0xaf8] sm:$0xff]
  %v410 = vld [vmem:[%s1 + $0xb00] sm:$0xff]
  %v411 = vld [vmem:[%s1 + $0xb08] sm:$0xff]
  %v412 = vld [vmem:[%s1 + $0xb10] sm:$0xff]
  %v413 = vld [vmem:[%s1 + $0xb18] sm:$0xff]
  %v414 = vld [vmem:[%s1 + $0xb20] sm:$0xff]
  %v415 = vld [vmem:[%s1 + $0xb28] sm:$0xff]
  %v416 = vld [vmem:[%s1 + $0xb30] sm:$0xff]
  %v417 = vld [vmem:[%s1 + $0xb38] sm:$0xff]
  %v418 = vld [vmem:[%s1 + $0xb40] sm:$0xff]
  %v419 = vld [vmem:[%s1 + $0xb48] sm:$0xff]
  %v420 = vld [vmem:[%s1 + $0xb50] sm:$0xff]
  %v421 = vld [vmem:[%s1 + $0xb58] sm:$0xff]
  %v422 = vld [vmem:[%s1 + $0xb60] sm:$0xff]
  %v423 = vld [vmem:[%s1 + $0xb68] sm:$0xff]
  %v424 = vld [vmem:[%s1 + $0xb70] sm:$0xff]
  %v425 = vld [vmem:[%s1 + $0xb78] sm:$0xff]
  %v426 = vld [vmem:[%s1 + $0xb80] sm:$0xff]
  %v427 = vld [vmem:[%s1 + $0xb88] sm:$0xff]
  %v428 = vld [vmem:[%s1 + $0xb90] sm:$0xff]
  %v429 = vld [vmem:[%s1 + $0xb98] sm:$0xff]
  %v430 = vld [vmem:[%s1 + $0xba0] sm:$0xff]
  %v431 = vld [vmem:[%s1 + $0xba8] sm:$0xff]
  %v432 = vld [vmem:[%s1 + $0xbb0] sm:$0xff]
  %v433 = vld [vmem:[%s1 + $0xbb8] sm:$0xff]
  %v434 = vld [vmem:[%s1 + $0xbc0] sm:$0xff]
  %v435 = vld [vmem:[%s1 + $0xbc8] sm:$0xff]
  %v436 = vld [vmem:[%s1 + $0xbd0] sm:$0xff]
  %v437 = vld [vmem:[%s1 + $0xbd8] sm:$0xff]
  %v438 = vld [vmem:[%s1 + $0xbe0] sm:$0xff]
  %v439 = vld [vmem:[%s1 + $0xbe8] sm:$0xff]
  %v440 = vld [vmem:[%s1 + $0xbf0] sm:$0xff]
  %v441 = vld [vmem:[%s1 + $0xbf8] sm:$0xff]
  %v442 = vld [vmem:[%s1 + $0xc00] sm:$0xff]
  %v443 = vld [vmem:[%s1 + $0xc08] sm:$0xff]
  %v444 = vld [vmem:[%s1 + $0xc10] sm:$0xff]
  %v445 = vld [vmem:[%s1 + $0xc18] sm:$0xff]
  %v446 = vld [vmem:[%s1 + $0xc20] sm:$0xff]
  %v447 = vld [vmem:[%s1 + $0xc28] sm:$0xff]
  %v448 = vld [vmem:[%s1 + $0xc30] sm:$0xff]
  %v449 = vld [vmem:[%s1 + $0xc38] sm:$0xff]
  %v450 = vld [vmem:[%s1 + $0xc40] sm:$0xff]
  %v451 = vld [vmem:[%s1 + $0xc48] sm:$0xff]
  %v452 = vld [vmem:[%s1 + $0xc50] sm:$0xff]
  %v453 = vld [vmem:[%s1 + $0xc58] sm:$0xff]
  %v454 = vld [vmem:[%s1 + $0xc60] sm:$0xff]
  %v455 = vld [vmem:[%s1 + $0xc68] sm:$0xff]
  %v456 = vld [vmem:[%s1 + $0xc70] sm:$0xff]
  %v457 = vld [vmem:[%s1 + $0xc78] sm:$0xff]
  %v458 = vld [vmem:[%s1 + $0xc80] sm:$0xff]
  %v459 = vld [vmem:[%s1 + $0xc88] sm:$0xff]
  %v460 = vld [vmem:[%s1 + $0xc90] sm:$0xff]
  %v461 = vld [vmem:[%s1 + $0xc98] sm:$0xff]
  %v462 = vld [vmem:[%s1 + $0xca0] sm:$0xff]
  %v463 = vld [vmem:[%s1 + $0xca8] sm:$0xff]
  %v464 = vld [vmem:[%s1 + $0xcb0] sm:$0xff]
  %v465 = vld [vmem:[%s1 + $0xcb8] sm:$0xff]
  %v466 = vld [vmem:[%s1 + $0xcc0] sm:$0xff]
  %v467 = vld [vmem:[%s1 + $0xcc8] sm:$0xff]
  %v468 = vld [vmem:[%s1 + $0xcd0] sm:$0xff]
  %v469 = vld [vmem:[%s1 + $0xcd8] sm:$0xff]
  %v470 = vld [vmem:[%s1 + $0xce0] sm:$0xff]
  %v471 = vld [vmem:[%s1 + $0xce8] sm:$0xff]
  %v472 = vld [vmem:[%s1 + $0xcf0] sm:$0xff]
  %v473 = vld [vmem:[%s1 + $0xcf8] sm:$0xff]
  %v474 = vld [vmem:[%s1 + $0xd00] sm:$0xff]
  %v475 = vld [vmem:[%s1 + $0xd08] sm:$0xff]
  %v476 = vld [vmem:[%s1 + $0xd10] sm:$0xff]
  %v477 = vld [vmem:[%s1 + $0xd18] sm:$0xff]
  %v478 = vld [vmem:[%s1 + $0xd20] sm:$0xff]
  %v479 = vld [vmem:[%s1 + $0xd28] sm:$0xff]
  %v480 = vld [vmem:[%s1 + $0xd30] sm:$0xff]
  %v481 = vld [vmem:[%s1 + $0xd38] sm:$0xff]
  %v482 = vld [vmem:[%s1 + $0xd40] sm:$0xff]
  %v483 = vld [vmem:[%s1 + $0xd48] sm:$0xff]
  %v484 = vld [vmem:[%s1 + $0xd50] sm:$0xff]
  %v485 = vld [vmem:[%s1 + $0xd58] sm:$0xff]
  %v486 = vld [vmem:[%s1 + $0xd60] sm:$0xff]
  %v487 = vld [vmem:[%s1 + $0xd68] sm:$0xff]
  %v488 = vld [vmem:[%s1 + $0xd70] sm:$0xff]
  %v489 = vld [vmem:[%s1 + $0xd78] sm:$0xff]
  %v490 = vld [vmem:[%s1 + $0xd80] sm:$0xff]
  %v491 = vld [vmem:[%s1 + $0xd88] sm:$0xff]
  %v492 = vld [vmem:[%s1 + $0xd90] sm:$0xff]
  %v493 = vld [vmem:[%s1 + $0xd98] sm:$0xff]
  %v494 = vld [vmem:[%s1 + $0xda0] sm:$0xff]
  %v495 = vld [vmem:[%s1 + $0xda8] sm:$0xff]
  %v496 = vld [vmem:[%s1 + $0xdb0] sm:$0xff]
  %v497 = vld [vmem:[%s1 + $0xdb8] sm:$0xff]
  %v498 = vld [vmem:[%s1 + $0xdc0] sm:$0xff]
  %v499 = vld [vmem:[%s1 + $0xdc8] sm:$0xff]
  %v500 = vld [vmem:[%s1 + $0xdd0] sm:$0xff]
  %v501 = vld [vmem:[%s1 + $0xdd8] sm:$0xff]
  %v502 = vld [vmem:[%s1 + $0xde0] sm:$0xff]
  %v503 = vld [vmem:[%s1 + $0xde8] sm:$0xff]
  %v504 = vld [vmem:[%s1 + $0xdf0] sm:$0xff]
  %v505 = vld [vmem:[%s1 + $0xdf8] sm:$0xff]
  %v506 = vld [vmem:[%s1 + $0xe00] sm:$0xff]
  %v507 = vld [vmem:[%s1 + $0xe08] sm:$0xff]
  %v508 = vld [vmem:[%s1 + $0xe10] sm:$0xff]
  %v509 = vld [vmem:[%s1 + $0xe18] sm:$0xff]
  %v510 = vld [vmem:[%s1 + $0xe20] sm:$0xff]
  %v511 = vld [vmem:[%s1 + $0xe28] sm:$0xff]
  %v512 = vld [vmem:[%s1 + $0xe30] sm:$0xff]
  %v513 = vld [vmem:[%s1 + $0xe38] sm:$0xff]
  %v514 = vld [vmem:[%s1 + $0xe40] sm:$0xff]
  %v515 = vld [vmem:[%s1 + $0xe48] sm:$0xff]
  %v516 = vld [vmem:[%s1 + $0xe50] sm:$0xff]
  %v517 = vld [vmem:[%s1 + $0xe58] sm:$0xff]
  %v518 = vld [vmem:[%s1 + $0xe60] sm:$0xff]
  %v519 = vld [vmem:[%s1 + $0xe68] sm:$0xff]
  %v520 = vld [vmem:[%s1 + $0xe70] sm:$0xff]
  %v521 = vld [vmem:[%s1 + $0xe78] sm:$0xff]
  %v522 = vld [vmem:[%s1 + $0xe80] sm:$0xff]
  %v523 = vld [vmem:[%s1 + $0xe88] sm:$0xff]
  %v524 = vld [vmem:[%s1 + $0xe90] sm:$0xff]
  %v525 = vld [vmem:[%s1 + $0xe98] sm:$0xff]
  %v526 = vld [vmem:[%s1 + $0xea0] sm:$0xff]
  %v527 = vld [vmem:[%s1 + $0xea8] sm:$0xff]
  %v528 = vld [vmem:[%s1 + $0xeb0] sm:$0xff]
  %v529 = vld [vmem:[%s1 + $0xeb8] sm:$0xff]
  %v530 = vld [vmem:[%s1 + $0xec0] sm:$0xff]
  %v531 = vld [vmem:[%s1 + $0xec8] sm:$0xff]
  %v532 = vld [vmem:[%s1 + $0xed0] sm:$0xff]
  %v533 = vld [vmem:[%s1 + $0xed8] sm:$0xff]
  %v534 = vld [vmem:[%s1 + $0xee0] sm:$0xff]
  %v535 = vld [vmem:[%s1 + $0xee8] sm:$0xff]
  %v536 = vld [vmem:[%s1 + $0xef0] sm:$0xff]
  %v537 = vld [vmem:[%s1 + $0xef8] sm:$0xff]
  %v538 = vld [vmem:[%s1 + $0xf00] sm:$0xff]
  %v539 = vld [vmem:[%s1 + $0xf08] sm:$0xff]
  %v540 = vld [vmem:[%s1 + $0xf10] sm:$0xff]
  %v541 = vld [vmem:[%s1 + $0xf18] sm:$0xff]
  %v542 = vld [vmem:[%s1 + $0xf20] sm:$0xff]
  %v543 = vld [vmem:[%s1 + $0xf28] sm:$0xff]
  %v544 = vld [vmem:[%s1 + $0xf30] sm:$0xff]
  %v545 = vld [vmem:[%s1 + $0xf38] sm:$0xff]
  %v546 = vld [vmem:[%s1 + $0xf40] sm:$0xff]
  %v547 = vld [vmem:[%s1 + $0xf48] sm:$0xff]
  %v548 = vld [vmem:[%s1 + $0xf50] sm:$0xff]
  %v549 = vld [vmem:[%s1 + $0xf58] sm:$0xff]
  %v550 = vld [vmem:[%s1 + $0xf60] sm:$0xff]
  %v551 = vld [vmem:[%s1 + $0xf68] sm:$0xff]
  %v552 = vld [vmem:[%s1 + $0xf70] sm:$0xff]
  %v553 = vld [vmem:[%s1 + $0xf78] sm:$0xff]
  %v554 = vld [vmem:[%s1 + $0xf80] sm:$0xff]
  %v555 = vld [vmem:[%s1 + $0xf88] sm:$0xff]
  %v556 = vld [vmem:[%s1 + $0xf90] sm:$0xff]
  %v557 = vld [vmem:[%s1 + $0xf98] sm:$0xff]
  %v558 = vld [vmem:[%s1 + $0xfa0] sm:$0xff]
  %v559 = vld [vmem:[%s1 + $0xfa8] sm:$0xff]
  %v560 = vld [vmem:[%s1 + $0xfb0] sm:$0xff]
  %v561 = vld [vmem:[%s1 + $0xfb8] sm:$0xff]
  %v562 = vld [vmem:[%s1 + $0xfc0] sm:$0xff]
  %v563 = vld [vmem:[%s1 + $0xfc8] sm:$0xff]
  %v564 = vld [vmem:[%s1 + $0xfd0] sm:$0xff]
  %v565 = vld [vmem:[%s1 + $0xfd8] sm:$0xff]
  %v566 = vld [vmem:[%s1 + $0xfe0] sm:$0xff]
  %v567 = vld [vmem:[%s1 + $0xfe8] sm:$0xff]
  %v568 = vld [vmem:[%s1 + $0xff0] sm:$0xff]
  %v569 = vld [vmem:[%s1 + $0xff8] sm:$0xff]
  %v570 = vld [vmem:[%s2] sm:$0x1]
  %v572 = vlaneseq
  %v573 = vshrl.u32 %v572, 7
  %v574 = vsub.s32 0, %v573
  %v575 = vrot.slane %v570, %v574
  %577 = vmatprep.subr.mxu0 0.0
  %578 = vmatpush1.msra.mxu0 %v58
  %579 = vmatprep.subr.mxu0 0.0
  %580 = vmatpush1.msra.mxu0 %v59
  %581 = vmatprep.subr.mxu0 0.0
  %582 = vmatpush1.msra.mxu0 %v60
  %583 = vmatprep.subr.mxu0 0.0
  %584 = vmatpush1.msra.mxu0 %v61
  %585 = vmatprep.subr.mxu0 0.0
  %586 = vmatpush1.msra.mxu0 %v62
  %587 = vmatprep.subr.mxu0 0.0
  %588 = vmatpush1.msra.mxu0 %v63
  %589 = vmatprep.subr.mxu0 0.0
  %590 = vmatpush1.msra.mxu0 %v64
  %591 = vmatprep.subr.mxu0 0.0
  %592 = vmatpush1.msra.mxu0 %v65
  %593 = vmatprep.subr.mxu0 0.0
  %594 = vmatpush1.msra.mxu0 %v66
  %595 = vmatprep.subr.mxu0 0.0
  %596 = vmatpush1.msra.mxu0 %v67
  %597 = vmatprep.subr.mxu0 0.0
  %598 = vmatpush1.msra.mxu0 %v68
  %599 = vmatprep.subr.mxu0 0.0
  %600 = vmatpush1.msra.mxu0 %v69
  %601 = vmatprep.subr.mxu0 0.0
  %602 = vmatpush1.msra.mxu0 %v70
  %603 = vmatprep.subr.mxu0 0.0
  %604 = vmatpush1.msra.mxu0 %v71
  %605 = vmatprep.subr.mxu0 0.0
  %606 = vmatpush1.msra.mxu0 %v72
  %607 = vmatprep.subr.mxu0 0.0
  %608 = vmatpush1.msra.mxu0 %v73
  %609 = vmatprep.subr.mxu0 0.0
  %610 = vmatpush1.msra.mxu0 %v74
  %611 = vmatprep.subr.mxu0 0.0
  %612 = vmatpush1.msra.mxu0 %v75
  %613 = vmatprep.subr.mxu0 0.0
  %614 = vmatpush1.msra.mxu0 %v76
  %615 = vmatprep.subr.mxu0 0.0
  %616 = vmatpush1.msra.mxu0 %v77
  %617 = vmatprep.subr.mxu0 0.0
  %618 = vmatpush1.msra.mxu0 %v78
  %619 = vmatprep.subr.mxu0 0.0
  %620 = vmatpush1.msra.mxu0 %v79
  %621 = vmatprep.subr.mxu0 0.0
  %622 = vmatpush1.msra.mxu0 %v80
  %623 = vmatprep.subr.mxu0 0.0
  %624 = vmatpush1.msra.mxu0 %v81
  %625 = vmatprep.subr.mxu0 0.0
  %626 = vmatpush1.msra.mxu0 %v82
  %627 = vmatprep.subr.mxu0 0.0
  %628 = vmatpush1.msra.mxu0 %v83
  %629 = vmatprep.subr.mxu0 0.0
  %630 = vmatpush1.msra.mxu0 %v84
  %631 = vmatprep.subr.mxu0 0.0
  %632 = vmatpush1.msra.mxu0 %v85
  %633 = vmatprep.subr.mxu0 0.0
  %634 = vmatpush1.msra.mxu0 %v86
  %635 = vmatprep.subr.mxu0 0.0
  %636 = vmatpush1.msra.mxu0 %v87
  %637 = vmatprep.subr.mxu0 0.0
  %638 = vmatpush1.msra.mxu0 %v88
  %639 = vmatprep.subr.mxu0 0.0
  %640 = vmatpush1.msra.mxu0 %v89
  %641 = vmatprep.mubr.f32.mxu0 %v27
  %642 = vmatmul.mubr.f32.gmra.mrb[0].mxu0 %v26
  %v643 = vpop.f32.mrb[0].mxu0
  %v644 = vadd.f32 %v575, %v643
  %v645 = vpop.f32.mrb[0].mxu0
  %646 = vdwg.mxu0
  %647 = vmatprep.subr.mxu0 0.0
  %648 = vmatpush1.msra.mxu0 %v90
  %649 = vmatprep.subr.mxu0 0.0
  %650 = vmatpush1.msra.mxu0 %v91
  %651 = vmatprep.subr.mxu0 0.0
  %652 = vmatpush1.msra.mxu0 %v92
  %653 = vmatprep.subr.mxu0 0.0
  %654 = vmatpush1.msra.mxu0 %v93
  %655 = vmatprep.subr.mxu0 0.0
  %656 = vmatpush1.msra.mxu0 %v94
  %657 = vmatprep.subr.mxu0 0.0
  %658 = vmatpush1.msra.mxu0 %v95
  %659 = vmatprep.subr.mxu0 0.0
  %660 = vmatpush1.msra.mxu0 %v96
  %661 = vmatprep.subr.mxu0 0.0
  %662 = vmatpush1.msra.mxu0 %v97
  %663 = vmatprep.subr.mxu0 0.0
  %664 = vmatpush1.msra.mxu0 %v98
  %665 = vmatprep.subr.mxu0 0.0
  %666 = vmatpush1.msra.mxu0 %v99
  %667 = vmatprep.subr.mxu0 0.0
  %668 = vmatpush1.msra.mxu0 %v100
  %669 = vmatprep.subr.mxu0 0.0
  %670 = vmatpush1.msra.mxu0 %v101
  %671 = vmatprep.subr.mxu0 0.0
  %672 = vmatpush1.msra.mxu0 %v102
  %673 = vmatprep.subr.mxu0 0.0
  %674 = vmatpush1.msra.mxu0 %v103
  %675 = vmatprep.subr.mxu0 0.0
  %676 = vmatpush1.msra.mxu0 %v104
  %677 = vmatprep.subr.mxu0 0.0
  %678 = vmatpush1.msra.mxu0 %v105
  %679 = vmatprep.subr.mxu0 0.0
  %680 = vmatpush1.msra.mxu0 %v106
  %681 = vmatprep.subr.mxu0 0.0
  %682 = vmatpush1.msra.mxu0 %v107
  %683 = vmatprep.subr.mxu0 0.0
  %684 = vmatpush1.msra.mxu0 %v108
  %685 = vmatprep.subr.mxu0 0.0
  %686 = vmatpush1.msra.mxu0 %v109
  %687 = vmatprep.subr.mxu0 0.0
  %688 = vmatpush1.msra.mxu0 %v110
  %689 = vmatprep.subr.mxu0 0.0
  %690 = vmatpush1.msra.mxu0 %v111
  %691 = vmatprep.subr.mxu0 0.0
  %692 = vmatpush1.msra.mxu0 %v112
  %693 = vmatprep.subr.mxu0 0.0
  %694 = vmatpush1.msra.mxu0 %v113
  %695 = vmatprep.subr.mxu0 0.0
  %696 = vmatpush1.msra.mxu0 %v114
  %697 = vmatprep.subr.mxu0 0.0
  %698 = vmatpush1.msra.mxu0 %v115
  %699 = vmatprep.subr.mxu0 0.0
  %700 = vmatpush1.msra.mxu0 %v116
  %701 = vmatprep.subr.mxu0 0.0
  %702 = vmatpush1.msra.mxu0 %v117
  %703 = vmatprep.subr.mxu0 0.0
  %704 = vmatpush1.msra.mxu0 %v118
  %705 = vmatprep.subr.mxu0 0.0
  %706 = vmatpush1.msra.mxu0 %v119
  %707 = vmatprep.subr.mxu0 0.0
  %708 = vmatpush1.msra.mxu0 %v120
  %709 = vmatprep.subr.mxu0 0.0
  %710 = vmatpush1.msra.mxu0 %v121
  %711 = vmatprep.mubr.f32.mxu0 %v29
  %712 = vmatmul.mubr.f32.gmra.mrb[0].mxu0 %v28
  %v713 = vpop.f32.mrb[0].mxu0
  %v714 = vadd.f32 %v644, %v713
  %v715 = vpop.f32.mrb[0].mxu0
  %716 = vdwg.mxu0
  %717 = vmatprep.subr.mxu0 0.0
  %718 = vmatpush1.msra.mxu0 %v122
  %719 = vmatprep.subr.mxu0 0.0
  %720 = vmatpush1.msra.mxu0 %v123
  %721 = vmatprep.subr.mxu0 0.0
  %722 = vmatpush1.msra.mxu0 %v124
  %723 = vmatprep.subr.mxu0 0.0
  %724 = vmatpush1.msra.mxu0 %v125
  %725 = vmatprep.subr.mxu0 0.0
  %726 = vmatpush1.msra.mxu0 %v126
  %727 = vmatprep.subr.mxu0 0.0
  %728 = vmatpush1.msra.mxu0 %v127
  %729 = vmatprep.subr.mxu0 0.0
  %730 = vmatpush1.msra.mxu0 %v128
  %731 = vmatprep.subr.mxu0 0.0
  %732 = vmatpush1.msra.mxu0 %v129
  %733 = vmatprep.subr.mxu0 0.0
  %734 = vmatpush1.msra.mxu0 %v130
  %735 = vmatprep.subr.mxu0 0.0
  %736 = vmatpush1.msra.mxu0 %v131
  %737 = vmatprep.subr.mxu0 0.0
  %738 = vmatpush1.msra.mxu0 %v132
  %739 = vmatprep.subr.mxu0 0.0
  %740 = vmatpush1.msra.mxu0 %v133
  %741 = vmatprep.subr.mxu0 0.0
  %742 = vmatpush1.msra.mxu0 %v134
  %743 = vmatprep.subr.mxu0 0.0
  %744 = vmatpush1.msra.mxu0 %v135
  %745 = vmatprep.subr.mxu0 0.0
  %746 = vmatpush1.msra.mxu0 %v136
  %747 = vmatprep.subr.mxu0 0.0
  %748 = vmatpush1.msra.mxu0 %v137
  %749 = vmatprep.subr.mxu0 0.0
  %750 = vmatpush1.msra.mxu0 %v138
  %751 = vmatprep.subr.mxu0 0.0
  %752 = vmatpush1.msra.mxu0 %v139
  %753 = vmatprep.subr.mxu0 0.0
  %754 = vmatpush1.msra.mxu0 %v140
  %755 = vmatprep.subr.mxu0 0.0
  %756 = vmatpush1.msra.mxu0 %v141
  %757 = vmatprep.subr.mxu0 0.0
  %758 = vmatpush1.msra.mxu0 %v142
  %759 = vmatprep.subr.mxu0 0.0
  %760 = vmatpush1.msra.mxu0 %v143
  %761 = vmatprep.subr.mxu0 0.0
  %762 = vmatpush1.msra.mxu0 %v144
  %763 = vmatprep.subr.mxu0 0.0
  %764 = vmatpush1.msra.mxu0 %v145
  %765 = vmatprep.subr.mxu0 0.0
  %766 = vmatpush1.msra.mxu0 %v146
  %767 = vmatprep.subr.mxu0 0.0
  %768 = vmatpush1.msra.mxu0 %v147
  %769 = vmatprep.subr.mxu0 0.0
  %770 = vmatpush1.msra.mxu0 %v148
  %771 = vmatprep.subr.mxu0 0.0
  %772 = vmatpush1.msra.mxu0 %v149
  %773 = vmatprep.subr.mxu0 0.0
  %774 = vmatpush1.msra.mxu0 %v150
  %775 = vmatprep.subr.mxu0 0.0
  %776 = vmatpush1.msra.mxu0 %v151
  %777 = vmatprep.subr.mxu0 0.0
  %778 = vmatpush1.msra.mxu0 %v152
  %779 = vmatprep.subr.mxu0 0.0
  %780 = vmatpush1.msra.mxu0 %v153
  %781 = vmatprep.mubr.f32.mxu0 %v31
  %782 = vmatmul.mubr.f32.gmra.mrb[0].mxu0 %v30
  %v783 = vpop.f32.mrb[0].mxu0
  %v784 = vadd.f32 %v714, %v783
  %v785 = vpop.f32.mrb[0].mxu0
  %786 = vdwg.mxu0
  %787 = vmatprep.subr.mxu0 0.0
  %788 = vmatpush1.msra.mxu0 %v154
  %789 = vmatprep.subr.mxu0 0.0
  %790 = vmatpush1.msra.mxu0 %v155
  %791 = vmatprep.subr.mxu0 0.0
  %792 = vmatpush1.msra.mxu0 %v156
  %793 = vmatprep.subr.mxu0 0.0
  %794 = vmatpush1.msra.mxu0 %v157
  %795 = vmatprep.subr.mxu0 0.0
  %796 = vmatpush1.msra.mxu0 %v158
  %797 = vmatprep.subr.mxu0 0.0
  %798 = vmatpush1.msra.mxu0 %v159
  %799 = vmatprep.subr.mxu0 0.0
  %800 = vmatpush1.msra.mxu0 %v160
  %801 = vmatprep.subr.mxu0 0.0
  %802 = vmatpush1.msra.mxu0 %v161
  %803 = vmatprep.subr.mxu0 0.0
  %804 = vmatpush1.msra.mxu0 %v162
  %805 = vmatprep.subr.mxu0 0.0
  %806 = vmatpush1.msra.mxu0 %v163
  %807 = vmatprep.subr.mxu0 0.0
  %808 = vmatpush1.msra.mxu0 %v164
  %809 = vmatprep.subr.mxu0 0.0
  %810 = vmatpush1.msra.mxu0 %v165
  %811 = vmatprep.subr.mxu0 0.0
  %812 = vmatpush1.msra.mxu0 %v166
  %813 = vmatprep.subr.mxu0 0.0
  %814 = vmatpush1.msra.mxu0 %v167
  %815 = vmatprep.subr.mxu0 0.0
  %816 = vmatpush1.msra.mxu0 %v168
  %817 = vmatprep.subr.mxu0 0.0
  %818 = vmatpush1.msra.mxu0 %v169
  %819 = vmatprep.subr.mxu0 0.0
  %820 = vmatpush1.msra.mxu0 %v170
  %821 = vmatprep.subr.mxu0 0.0
  %822 = vmatpush1.msra.mxu0 %v171
  %823 = vmatprep.subr.mxu0 0.0
  %824 = vmatpush1.msra.mxu0 %v172
  %825 = vmatprep.subr.mxu0 0.0
  %826 = vmatpush1.msra.mxu0 %v173
  %827 = vmatprep.subr.mxu0 0.0
  %828 = vmatpush1.msra.mxu0 %v174
  %829 = vmatprep.subr.mxu0 0.0
  %830 = vmatpush1.msra.mxu0 %v175
  %831 = vmatprep.subr.mxu0 0.0
  %832 = vmatpush1.msra.mxu0 %v176
  %833 = vmatprep.subr.mxu0 0.0
  %834 = vmatpush1.msra.mxu0 %v177
  %835 = vmatprep.subr.mxu0 0.0
  %836 = vmatpush1.msra.mxu0 %v178
  %837 = vmatprep.subr.mxu0 0.0
  %838 = vmatpush1.msra.mxu0 %v179
  %839 = vmatprep.subr.mxu0 0.0
  %840 = vmatpush1.msra.mxu0 %v180
  %841 = vmatprep.subr.mxu0 0.0
  %842 = vmatpush1.msra.mxu0 %v181
  %843 = vmatprep.subr.mxu0 0.0
  %844 = vmatpush1.msra.mxu0 %v182
  %845 = vmatprep.subr.mxu0 0.0
  %846 = vmatpush1.msra.mxu0 %v183
  %847 = vmatprep.subr.mxu0 0.0
  %848 = vmatpush1.msra.mxu0 %v184
  %849 = vmatprep.subr.mxu0 0.0
  %850 = vmatpush1.msra.mxu0 %v185
  %851 = vmatprep.mubr.f32.mxu0 %v33
  %852 = vmatmul.mubr.f32.gmra.mrb[0].mxu0 %v32
  %v853 = vpop.f32.mrb[0].mxu0
  %v854 = vadd.f32 %v784, %v853
  %v855 = vpop.f32.mrb[0].mxu0
  %856 = vdwg.mxu0
  %857 = vmatprep.subr.mxu0 0.0
  %858 = vmatpush1.msra.mxu0 %v186
  %859 = vmatprep.subr.mxu0 0.0
  %860 = vmatpush1.msra.mxu0 %v187
  %861 = vmatprep.subr.mxu0 0.0
  %862 = vmatpush1.msra.mxu0 %v188
  %863 = vmatprep.subr.mxu0 0.0
  %864 = vmatpush1.msra.mxu0 %v189
  %865 = vmatprep.subr.mxu0 0.0
  %866 = vmatpush1.msra.mxu0 %v190
  %867 = vmatprep.subr.mxu0 0.0
  %868 = vmatpush1.msra.mxu0 %v191
  %869 = vmatprep.subr.mxu0 0.0
  %870 = vmatpush1.msra.mxu0 %v192
  %871 = vmatprep.subr.mxu0 0.0
  %872 = vmatpush1.msra.mxu0 %v193
  %873 = vmatprep.subr.mxu0 0.0
  %874 = vmatpush1.msra.mxu0 %v194
  %875 = vmatprep.subr.mxu0 0.0
  %876 = vmatpush1.msra.mxu0 %v195
  %877 = vmatprep.subr.mxu0 0.0
  %878 = vmatpush1.msra.mxu0 %v196
  %879 = vmatprep.subr.mxu0 0.0
  %880 = vmatpush1.msra.mxu0 %v197
  %881 = vmatprep.subr.mxu0 0.0
  %882 = vmatpush1.msra.mxu0 %v198
  %883 = vmatprep.subr.mxu0 0.0
  %884 = vmatpush1.msra.mxu0 %v199
  %885 = vmatprep.subr.mxu0 0.0
  %886 = vmatpush1.msra.mxu0 %v200
  %887 = vmatprep.subr.mxu0 0.0
  %888 = vmatpush1.msra.mxu0 %v201
  %889 = vmatprep.subr.mxu0 0.0
  %890 = vmatpush1.msra.mxu0 %v202
  %891 = vmatprep.subr.mxu0 0.0
  %892 = vmatpush1.msra.mxu0 %v203
  %893 = vmatprep.subr.mxu0 0.0
  %894 = vmatpush1.msra.mxu0 %v204
  %895 = vmatprep.subr.mxu0 0.0
  %896 = vmatpush1.msra.mxu0 %v205
  %897 = vmatprep.subr.mxu0 0.0
  %898 = vmatpush1.msra.mxu0 %v206
  %899 = vmatprep.subr.mxu0 0.0
  %900 = vmatpush1.msra.mxu0 %v207
  %901 = vmatprep.subr.mxu0 0.0
  %902 = vmatpush1.msra.mxu0 %v208
  %903 = vmatprep.subr.mxu0 0.0
  %904 = vmatpush1.msra.mxu0 %v209
  %905 = vmatprep.subr.mxu0 0.0
  %906 = vmatpush1.msra.mxu0 %v210
  %907 = vmatprep.subr.mxu0 0.0
  %908 = vmatpush1.msra.mxu0 %v211
  %909 = vmatprep.subr.mxu0 0.0
  %910 = vmatpush1.msra.mxu0 %v212
  %911 = vmatprep.subr.mxu0 0.0
  %912 = vmatpush1.msra.mxu0 %v213
  %913 = vmatprep.subr.mxu0 0.0
  %914 = vmatpush1.msra.mxu0 %v214
  %915 = vmatprep.subr.mxu0 0.0
  %916 = vmatpush1.msra.mxu0 %v215
  %917 = vmatprep.subr.mxu0 0.0
  %918 = vmatpush1.msra.mxu0 %v216
  %919 = vmatprep.subr.mxu0 0.0
  %920 = vmatpush1.msra.mxu0 %v217
  %921 = vmatprep.mubr.f32.mxu0 %v35
  %922 = vmatmul.mubr.f32.gmra.mrb[0].mxu0 %v34
  %v923 = vpop.f32.mrb[0].mxu0
  %v924 = vadd.f32 %v854, %v923
  %v925 = vpop.f32.mrb[0].mxu0
  %926 = vdwg.mxu0
  %927 = vmatprep.subr.mxu0 0.0
  %928 = vmatpush1.msra.mxu0 %v218
  %929 = vmatprep.subr.mxu0 0.0
  %930 = vmatpush1.msra.mxu0 %v219
  %931 = vmatprep.subr.mxu0 0.0
  %932 = vmatpush1.msra.mxu0 %v220
  %933 = vmatprep.subr.mxu0 0.0
  %934 = vmatpush1.msra.mxu0 %v221
  %935 = vmatprep.subr.mxu0 0.0
  %936 = vmatpush1.msra.mxu0 %v222
  %937 = vmatprep.subr.mxu0 0.0
  %938 = vmatpush1.msra.mxu0 %v223
  %939 = vmatprep.subr.mxu0 0.0
  %940 = vmatpush1.msra.mxu0 %v224
  %941 = vmatprep.subr.mxu0 0.0
  %942 = vmatpush1.msra.mxu0 %v225
  %943 = vmatprep.subr.mxu0 0.0
  %944 = vmatpush1.msra.mxu0 %v226
  %945 = vmatprep.subr.mxu0 0.0
  %946 = vmatpush1.msra.mxu0 %v227
  %947 = vmatprep.subr.mxu0 0.0
  %948 = vmatpush1.msra.mxu0 %v228
  %949 = vmatprep.subr.mxu0 0.0
  %950 = vmatpush1.msra.mxu0 %v229
  %951 = vmatprep.subr.mxu0 0.0
  %952 = vmatpush1.msra.mxu0 %v230
  %953 = vmatprep.subr.mxu0 0.0
  %954 = vmatpush1.msra.mxu0 %v231
  %955 = vmatprep.subr.mxu0 0.0
  %956 = vmatpush1.msra.mxu0 %v232
  %957 = vmatprep.subr.mxu0 0.0
  %958 = vmatpush1.msra.mxu0 %v233
  %959 = vmatprep.subr.mxu0 0.0
  %960 = vmatpush1.msra.mxu0 %v234
  %961 = vmatprep.subr.mxu0 0.0
  %962 = vmatpush1.msra.mxu0 %v235
  %963 = vmatprep.subr.mxu0 0.0
  %964 = vmatpush1.msra.mxu0 %v236
  %965 = vmatprep.subr.mxu0 0.0
  %966 = vmatpush1.msra.mxu0 %v237
  %967 = vmatprep.subr.mxu0 0.0
  %968 = vmatpush1.msra.mxu0 %v238
  %969 = vmatprep.subr.mxu0 0.0
  %970 = vmatpush1.msra.mxu0 %v239
  %971 = vmatprep.subr.mxu0 0.0
  %972 = vmatpush1.msra.mxu0 %v240
  %973 = vmatprep.subr.mxu0 0.0
  %974 = vmatpush1.msra.mxu0 %v241
  %975 = vmatprep.subr.mxu0 0.0
  %976 = vmatpush1.msra.mxu0 %v242
  %977 = vmatprep.subr.mxu0 0.0
  %978 = vmatpush1.msra.mxu0 %v243
  %979 = vmatprep.subr.mxu0 0.0
  %980 = vmatpush1.msra.mxu0 %v244
  %981 = vmatprep.subr.mxu0 0.0
  %982 = vmatpush1.msra.mxu0 %v245
  %983 = vmatprep.subr.mxu0 0.0
  %984 = vmatpush1.msra.mxu0 %v246
  %985 = vmatprep.subr.mxu0 0.0
  %986 = vmatpush1.msra.mxu0 %v247
  %987 = vmatprep.subr.mxu0 0.0
  %988 = vmatpush1.msra.mxu0 %v248
  %989 = vmatprep.subr.mxu0 0.0
  %990 = vmatpush1.msra.mxu0 %v249
  %991 = vmatprep.mubr.f32.mxu0 %v37
  %992 = vmatmul.mubr.f32.gmra.mrb[0].mxu0 %v36
  %v993 = vpop.f32.mrb[0].mxu0
  %v994 = vadd.f32 %v924, %v993
  %v995 = vpop.f32.mrb[0].mxu0
  %996 = vdwg.mxu0
  %997 = vmatprep.subr.mxu0 0.0
  %998 = vmatpush1.msra.mxu0 %v250
  %999 = vmatprep.subr.mxu0 0.0
  %1000 = vmatpush1.msra.mxu0 %v251
  %1001 = vmatprep.subr.mxu0 0.0
  %1002 = vmatpush1.msra.mxu0 %v252
  %1003 = vmatprep.subr.mxu0 0.0
  %1004 = vmatpush1.msra.mxu0 %v253
  %1005 = vmatprep.subr.mxu0 0.0
  %1006 = vmatpush1.msra.mxu0 %v254
  %1007 = vmatprep.subr.mxu0 0.0
  %1008 = vmatpush1.msra.mxu0 %v255
  %1009 = vmatprep.subr.mxu0 0.0
  %1010 = vmatpush1.msra.mxu0 %v256
  %1011 = vmatprep.subr.mxu0 0.0
  %1012 = vmatpush1.msra.mxu0 %v257
  %1013 = vmatprep.subr.mxu0 0.0
  %1014 = vmatpush1.msra.mxu0 %v258
  %1015 = vmatprep.subr.mxu0 0.0
  %1016 = vmatpush1.msra.mxu0 %v259
  %1017 = vmatprep.subr.mxu0 0.0
  %1018 = vmatpush1.msra.mxu0 %v260
  %1019 = vmatprep.subr.mxu0 0.0
  %1020 = vmatpush1.msra.mxu0 %v261
  %1021 = vmatprep.subr.mxu0 0.0
  %1022 = vmatpush1.msra.mxu0 %v262
  %1023 = vmatprep.subr.mxu0 0.0
  %1024 = vmatpush1.msra.mxu0 %v263
  %1025 = vmatprep.subr.mxu0 0.0
  %1026 = vmatpush1.msra.mxu0 %v264
  %1027 = vmatprep.subr.mxu0 0.0
  %1028 = vmatpush1.msra.mxu0 %v265
  %1029 = vmatprep.subr.mxu0 0.0
  %1030 = vmatpush1.msra.mxu0 %v266
  %1031 = vmatprep.subr.mxu0 0.0
  %1032 = vmatpush1.msra.mxu0 %v267
  %1033 = vmatprep.subr.mxu0 0.0
  %1034 = vmatpush1.msra.mxu0 %v268
  %1035 = vmatprep.subr.mxu0 0.0
  %1036 = vmatpush1.msra.mxu0 %v269
  %1037 = vmatprep.subr.mxu0 0.0
  %1038 = vmatpush1.msra.mxu0 %v270
  %1039 = vmatprep.subr.mxu0 0.0
  %1040 = vmatpush1.msra.mxu0 %v271
  %1041 = vmatprep.subr.mxu0 0.0
  %1042 = vmatpush1.msra.mxu0 %v272
  %1043 = vmatprep.subr.mxu0 0.0
  %1044 = vmatpush1.msra.mxu0 %v273
  %1045 = vmatprep.subr.mxu0 0.0
  %1046 = vmatpush1.msra.mxu0 %v274
  %1047 = vmatprep.subr.mxu0 0.0
  %1048 = vmatpush1.msra.mxu0 %v275
  %1049 = vmatprep.subr.mxu0 0.0
  %1050 = vmatpush1.msra.mxu0 %v276
  %1051 = vmatprep.subr.mxu0 0.0
  %1052 = vmatpush1.msra.mxu0 %v277
  %1053 = vmatprep.subr.mxu0 0.0
  %1054 = vmatpush1.msra.mxu0 %v278
  %1055 = vmatprep.subr.mxu0 0.0
  %1056 = vmatpush1.msra.mxu0 %v279
  %1057 = vmatprep.subr.mxu0 0.0
  %1058 = vmatpush1.msra.mxu0 %v280
  %1059 = vmatprep.subr.mxu0 0.0
  %1060 = vmatpush1.msra.mxu0 %v281
  %1061 = vmatprep.mubr.f32.mxu0 %v39
  %1062 = vmatmul.mubr.f32.gmra.mrb[0].mxu0 %v38
  %v1063 = vpop.f32.mrb[0].mxu0
  %v1064 = vadd.f32 %v994, %v1063
  %v1065 = vpop.f32.mrb[0].mxu0
  %1066 = vdwg.mxu0
  %1067 = vmatprep.subr.mxu0 0.0
  %1068 = vmatpush1.msra.mxu0 %v282
  %1069 = vmatprep.subr.mxu0 0.0
  %1070 = vmatpush1.msra.mxu0 %v283
  %1071 = vmatprep.subr.mxu0 0.0
  %1072 = vmatpush1.msra.mxu0 %v284
  %1073 = vmatprep.subr.mxu0 0.0
  %1074 = vmatpush1.msra.mxu0 %v285
  %1075 = vmatprep.subr.mxu0 0.0
  %1076 = vmatpush1.msra.mxu0 %v286
  %1077 = vmatprep.subr.mxu0 0.0
  %1078 = vmatpush1.msra.mxu0 %v287
  %1079 = vmatprep.subr.mxu0 0.0
  %1080 = vmatpush1.msra.mxu0 %v288
  %1081 = vmatprep.subr.mxu0 0.0
  %1082 = vmatpush1.msra.mxu0 %v289
  %1083 = vmatprep.subr.mxu0 0.0
  %1084 = vmatpush1.msra.mxu0 %v290
  %1085 = vmatprep.subr.mxu0 0.0
  %1086 = vmatpush1.msra.mxu0 %v291
  %1087 = vmatprep.subr.mxu0 0.0
  %1088 = vmatpush1.msra.mxu0 %v292
  %1089 = vmatprep.subr.mxu0 0.0
  %1090 = vmatpush1.msra.mxu0 %v293
  %1091 = vmatprep.subr.mxu0 0.0
  %1092 = vmatpush1.msra.mxu0 %v294
  %1093 = vmatprep.subr.mxu0 0.0
  %1094 = vmatpush1.msra.mxu0 %v295
  %1095 = vmatprep.subr.mxu0 0.0
  %1096 = vmatpush1.msra.mxu0 %v296
  %1097 = vmatprep.subr.mxu0 0.0
  %1098 = vmatpush1.msra.mxu0 %v297
  %1099 = vmatprep.subr.mxu0 0.0
  %1100 = vmatpush1.msra.mxu0 %v298
  %1101 = vmatprep.subr.mxu0 0.0
  %1102 = vmatpush1.msra.mxu0 %v299
  %1103 = vmatprep.subr.mxu0 0.0
  %1104 = vmatpush1.msra.mxu0 %v300
  %1105 = vmatprep.subr.mxu0 0.0
  %1106 = vmatpush1.msra.mxu0 %v301
  %1107 = vmatprep.subr.mxu0 0.0
  %1108 = vmatpush1.msra.mxu0 %v302
  %1109 = vmatprep.subr.mxu0 0.0
  %1110 = vmatpush1.msra.mxu0 %v303
  %1111 = vmatprep.subr.mxu0 0.0
  %1112 = vmatpush1.msra.mxu0 %v304
  %1113 = vmatprep.subr.mxu0 0.0
  %1114 = vmatpush1.msra.mxu0 %v305
  %1115 = vmatprep.subr.mxu0 0.0
  %1116 = vmatpush1.msra.mxu0 %v306
  %1117 = vmatprep.subr.mxu0 0.0
  %1118 = vmatpush1.msra.mxu0 %v307
  %1119 = vmatprep.subr.mxu0 0.0
  %1120 = vmatpush1.msra.mxu0 %v308
  %1121 = vmatprep.subr.mxu0 0.0
  %1122 = vmatpush1.msra.mxu0 %v309
  %1123 = vmatprep.subr.mxu0 0.0
  %1124 = vmatpush1.msra.mxu0 %v310
  %1125 = vmatprep.subr.mxu0 0.0
  %1126 = vmatpush1.msra.mxu0 %v311
  %1127 = vmatprep.subr.mxu0 0.0
  %1128 = vmatpush1.msra.mxu0 %v312
  %1129 = vmatprep.subr.mxu0 0.0
  %1130 = vmatpush1.msra.mxu0 %v313
  %1131 = vmatprep.mubr.f32.mxu0 %v41
  %1132 = vmatmul.mubr.f32.gmra.mrb[0].mxu0 %v40
  %v1133 = vpop.f32.mrb[0].mxu0
  %v1134 = vadd.f32 %v1064, %v1133
  %v1135 = vpop.f32.mrb[0].mxu0
  %1136 = vdwg.mxu0
  %1137 = vmatprep.subr.mxu0 0.0
  %1138 = vmatpush1.msra.mxu0 %v314
  %1139 = vmatprep.subr.mxu0 0.0
  %1140 = vmatpush1.msra.mxu0 %v315
  %1141 = vmatprep.subr.mxu0 0.0
  %1142 = vmatpush1.msra.mxu0 %v316
  %1143 = vmatprep.subr.mxu0 0.0
  %1144 = vmatpush1.msra.mxu0 %v317
  %1145 = vmatprep.subr.mxu0 0.0
  %1146 = vmatpush1.msra.mxu0 %v318
  %1147 = vmatprep.subr.mxu0 0.0
  %1148 = vmatpush1.msra.mxu0 %v319
  %1149 = vmatprep.subr.mxu0 0.0
  %1150 = vmatpush1.msra.mxu0 %v320
  %1151 = vmatprep.subr.mxu0 0.0
  %1152 = vmatpush1.msra.mxu0 %v321
  %1153 = vmatprep.subr.mxu0 0.0
  %1154 = vmatpush1.msra.mxu0 %v322
  %1155 = vmatprep.subr.mxu0 0.0
  %1156 = vmatpush1.msra.mxu0 %v323
  %1157 = vmatprep.subr.mxu0 0.0
  %1158 = vmatpush1.msra.mxu0 %v324
  %1159 = vmatprep.subr.mxu0 0.0
  %1160 = vmatpush1.msra.mxu0 %v325
  %1161 = vmatprep.subr.mxu0 0.0
  %1162 = vmatpush1.msra.mxu0 %v326
  %1163 = vmatprep.subr.mxu0 0.0
  %1164 = vmatpush1.msra.mxu0 %v327
  %1165 = vmatprep.subr.mxu0 0.0
  %1166 = vmatpush1.msra.mxu0 %v328
  %1167 = vmatprep.subr.mxu0 0.0
  %1168 = vmatpush1.msra.mxu0 %v329
  %1169 = vmatprep.subr.mxu0 0.0
  %1170 = vmatpush1.msra.mxu0 %v330
  %1171 = vmatprep.subr.mxu0 0.0
  %1172 = vmatpush1.msra.mxu0 %v331
  %1173 = vmatprep.subr.mxu0 0.0
  %1174 = vmatpush1.msra.mxu0 %v332
  %1175 = vmatprep.subr.mxu0 0.0
  %1176 = vmatpush1.msra.mxu0 %v333
  %1177 = vmatprep.subr.mxu0 0.0
  %1178 = vmatpush1.msra.mxu0 %v334
  %1179 = vmatprep.subr.mxu0 0.0
  %1180 = vmatpush1.msra.mxu0 %v335
  %1181 = vmatprep.subr.mxu0 0.0
  %1182 = vmatpush1.msra.mxu0 %v336
  %1183 = vmatprep.subr.mxu0 0.0
  %1184 = vmatpush1.msra.mxu0 %v337
  %1185 = vmatprep.subr.mxu0 0.0
  %1186 = vmatpush1.msra.mxu0 %v338
  %1187 = vmatprep.subr.mxu0 0.0
  %1188 = vmatpush1.msra.mxu0 %v339
  %1189 = vmatprep.subr.mxu0 0.0
  %1190 = vmatpush1.msra.mxu0 %v340
  %1191 = vmatprep.subr.mxu0 0.0
  %1192 = vmatpush1.msra.mxu0 %v341
  %1193 = vmatprep.subr.mxu0 0.0
  %1194 = vmatpush1.msra.mxu0 %v342
  %1195 = vmatprep.subr.mxu0 0.0
  %1196 = vmatpush1.msra.mxu0 %v343
  %1197 = vmatprep.subr.mxu0 0.0
  %1198 = vmatpush1.msra.mxu0 %v344
  %1199 = vmatprep.subr.mxu0 0.0
  %1200 = vmatpush1.msra.mxu0 %v345
  %1201 = vmatprep.mubr.f32.mxu0 %v43
  %1202 = vmatmul.mubr.f32.gmra.mrb[0].mxu0 %v42
  %v1203 = vpop.f32.mrb[0].mxu0
  %v1204 = vadd.f32 %v1134, %v1203
  %v1205 = vpop.f32.mrb[0].mxu0
  %1206 = vdwg.mxu0
  %1207 = vmatprep.subr.mxu0 0.0
  %1208 = vmatpush1.msra.mxu0 %v346
  %1209 = vmatprep.subr.mxu0 0.0
  %1210 = vmatpush1.msra.mxu0 %v347
  %1211 = vmatprep.subr.mxu0 0.0
  %1212 = vmatpush1.msra.mxu0 %v348
  %1213 = vmatprep.subr.mxu0 0.0
  %1214 = vmatpush1.msra.mxu0 %v349
  %1215 = vmatprep.subr.mxu0 0.0
  %1216 = vmatpush1.msra.mxu0 %v350
  %1217 = vmatprep.subr.mxu0 0.0
  %1218 = vmatpush1.msra.mxu0 %v351
  %1219 = vmatprep.subr.mxu0 0.0
  %1220 = vmatpush1.msra.mxu0 %v352
  %1221 = vmatprep.subr.mxu0 0.0
  %1222 = vmatpush1.msra.mxu0 %v353
  %1223 = vmatprep.subr.mxu0 0.0
  %1224 = vmatpush1.msra.mxu0 %v354
  %1225 = vmatprep.subr.mxu0 0.0
  %1226 = vmatpush1.msra.mxu0 %v355
  %1227 = vmatprep.subr.mxu0 0.0
  %1228 = vmatpush1.msra.mxu0 %v356
  %1229 = vmatprep.subr.mxu0 0.0
  %1230 = vmatpush1.msra.mxu0 %v357
  %1231 = vmatprep.subr.mxu0 0.0
  %1232 = vmatpush1.msra.mxu0 %v358
  %1233 = vmatprep.subr.mxu0 0.0
  %1234 = vmatpush1.msra.mxu0 %v359
  %1235 = vmatprep.subr.mxu0 0.0
  %1236 = vmatpush1.msra.mxu0 %v360
  %1237 = vmatprep.subr.mxu0 0.0
  %1238 = vmatpush1.msra.mxu0 %v361
  %1239 = vmatprep.subr.mxu0 0.0
  %1240 = vmatpush1.msra.mxu0 %v362
  %1241 = vmatprep.subr.mxu0 0.0
  %1242 = vmatpush1.msra.mxu0 %v363
  %1243 = vmatprep.subr.mxu0 0.0
  %1244 = vmatpush1.msra.mxu0 %v364
  %1245 = vmatprep.subr.mxu0 0.0
  %1246 = vmatpush1.msra.mxu0 %v365
  %1247 = vmatprep.subr.mxu0 0.0
  %1248 = vmatpush1.msra.mxu0 %v366
  %1249 = vmatprep.subr.mxu0 0.0
  %1250 = vmatpush1.msra.mxu0 %v367
  %1251 = vmatprep.subr.mxu0 0.0
  %1252 = vmatpush1.msra.mxu0 %v368
  %1253 = vmatprep.subr.mxu0 0.0
  %1254 = vmatpush1.msra.mxu0 %v369
  %1255 = vmatprep.subr.mxu0 0.0
  %1256 = vmatpush1.msra.mxu0 %v370
  %1257 = vmatprep.subr.mxu0 0.0
  %1258 = vmatpush1.msra.mxu0 %v371
  %1259 = vmatprep.subr.mxu0 0.0
  %1260 = vmatpush1.msra.mxu0 %v372
  %1261 = vmatprep.subr.mxu0 0.0
  %1262 = vmatpush1.msra.mxu0 %v373
  %1263 = vmatprep.subr.mxu0 0.0
  %1264 = vmatpush1.msra.mxu0 %v374
  %1265 = vmatprep.subr.mxu0 0.0
  %1266 = vmatpush1.msra.mxu0 %v375
  %1267 = vmatprep.subr.mxu0 0.0
  %1268 = vmatpush1.msra.mxu0 %v376
  %1269 = vmatprep.subr.mxu0 0.0
  %1270 = vmatpush1.msra.mxu0 %v377
  %1271 = vmatprep.mubr.f32.mxu0 %v45
  %1272 = vmatmul.mubr.f32.gmra.mrb[0].mxu0 %v44
  %v1273 = vpop.f32.mrb[0].mxu0
  %v1274 = vadd.f32 %v1204, %v1273
  %v1275 = vpop.f32.mrb[0].mxu0
  %1276 = vdwg.mxu0
  %1277 = vmatprep.subr.mxu0 0.0
  %1278 = vmatpush1.msra.mxu0 %v378
  %1279 = vmatprep.subr.mxu0 0.0
  %1280 = vmatpush1.msra.mxu0 %v379
  %1281 = vmatprep.subr.mxu0 0.0
  %1282 = vmatpush1.msra.mxu0 %v380
  %1283 = vmatprep.subr.mxu0 0.0
  %1284 = vmatpush1.msra.mxu0 %v381
  %1285 = vmatprep.subr.mxu0 0.0
  %1286 = vmatpush1.msra.mxu0 %v382
  %1287 = vmatprep.subr.mxu0 0.0
  %1288 = vmatpush1.msra.mxu0 %v383
  %1289 = vmatprep.subr.mxu0 0.0
  %1290 = vmatpush1.msra.mxu0 %v384
  %1291 = vmatprep.subr.mxu0 0.0
  %1292 = vmatpush1.msra.mxu0 %v385
  %1293 = vmatprep.subr.mxu0 0.0
  %1294 = vmatpush1.msra.mxu0 %v386
  %1295 = vmatprep.subr.mxu0 0.0
  %1296 = vmatpush1.msra.mxu0 %v387
  %1297 = vmatprep.subr.mxu0 0.0
  %1298 = vmatpush1.msra.mxu0 %v388
  %1299 = vmatprep.subr.mxu0 0.0
  %1300 = vmatpush1.msra.mxu0 %v389
  %1301 = vmatprep.subr.mxu0 0.0
  %1302 = vmatpush1.msra.mxu0 %v390
  %1303 = vmatprep.subr.mxu0 0.0
  %1304 = vmatpush1.msra.mxu0 %v391
  %1305 = vmatprep.subr.mxu0 0.0
  %1306 = vmatpush1.msra.mxu0 %v392
  %1307 = vmatprep.subr.mxu0 0.0
  %1308 = vmatpush1.msra.mxu0 %v393
  %1309 = vmatprep.subr.mxu0 0.0
  %1310 = vmatpush1.msra.mxu0 %v394
  %1311 = vmatprep.subr.mxu0 0.0
  %1312 = vmatpush1.msra.mxu0 %v395
  %1313 = vmatprep.subr.mxu0 0.0
  %1314 = vmatpush1.msra.mxu0 %v396
  %1315 = vmatprep.subr.mxu0 0.0
  %1316 = vmatpush1.msra.mxu0 %v397
  %1317 = vmatprep.subr.mxu0 0.0
  %1318 = vmatpush1.msra.mxu0 %v398
  %1319 = vmatprep.subr.mxu0 0.0
  %1320 = vmatpush1.msra.mxu0 %v399
  %1321 = vmatprep.subr.mxu0 0.0
  %1322 = vmatpush1.msra.mxu0 %v400
  %1323 = vmatprep.subr.mxu0 0.0
  %1324 = vmatpush1.msra.mxu0 %v401
  %1325 = vmatprep.subr.mxu0 0.0
  %1326 = vmatpush1.msra.mxu0 %v402
  %1327 = vmatprep.subr.mxu0 0.0
  %1328 = vmatpush1.msra.mxu0 %v403
  %1329 = vmatprep.subr.mxu0 0.0
  %1330 = vmatpush1.msra.mxu0 %v404
  %1331 = vmatprep.subr.mxu0 0.0
  %1332 = vmatpush1.msra.mxu0 %v405
  %1333 = vmatprep.subr.mxu0 0.0
  %1334 = vmatpush1.msra.mxu0 %v406
  %1335 = vmatprep.subr.mxu0 0.0
  %1336 = vmatpush1.msra.mxu0 %v407
  %1337 = vmatprep.subr.mxu0 0.0
  %1338 = vmatpush1.msra.mxu0 %v408
  %1339 = vmatprep.subr.mxu0 0.0
  %1340 = vmatpush1.msra.mxu0 %v409
  %1341 = vmatprep.mubr.f32.mxu0 %v47
  %1342 = vmatmul.mubr.f32.gmra.mrb[0].mxu0 %v46
  %v1343 = vpop.f32.mrb[0].mxu0
  %v1344 = vadd.f32 %v1274, %v1343
  %v1345 = vpop.f32.mrb[0].mxu0
  %1346 = vdwg.mxu0
  %1347 = vmatprep.subr.mxu0 0.0
  %1348 = vmatpush1.msra.mxu0 %v410
  %1349 = vmatprep.subr.mxu0 0.0
  %1350 = vmatpush1.msra.mxu0 %v411
  %1351 = vmatprep.subr.mxu0 0.0
  %1352 = vmatpush1.msra.mxu0 %v412
  %1353 = vmatprep.subr.mxu0 0.0
  %1354 = vmatpush1.msra.mxu0 %v413
  %1355 = vmatprep.subr.mxu0 0.0
  %1356 = vmatpush1.msra.mxu0 %v414
  %1357 = vmatprep.subr.mxu0 0.0
  %1358 = vmatpush1.msra.mxu0 %v415
  %1359 = vmatprep.subr.mxu0 0.0
  %1360 = vmatpush1.msra.mxu0 %v416
  %1361 = vmatprep.subr.mxu0 0.0
  %1362 = vmatpush1.msra.mxu0 %v417
  %1363 = vmatprep.subr.mxu0 0.0
  %1364 = vmatpush1.msra.mxu0 %v418
  %1365 = vmatprep.subr.mxu0 0.0
  %1366 = vmatpush1.msra.mxu0 %v419
  %1367 = vmatprep.subr.mxu0 0.0
  %1368 = vmatpush1.msra.mxu0 %v420
  %1369 = vmatprep.subr.mxu0 0.0
  %1370 = vmatpush1.msra.mxu0 %v421
  %1371 = vmatprep.subr.mxu0 0.0
  %1372 = vmatpush1.msra.mxu0 %v422
  %1373 = vmatprep.subr.mxu0 0.0
  %1374 = vmatpush1.msra.mxu0 %v423
  %1375 = vmatprep.subr.mxu0 0.0
  %1376 = vmatpush1.msra.mxu0 %v424
  %1377 = vmatprep.subr.mxu0 0.0
  %1378 = vmatpush1.msra.mxu0 %v425
  %1379 = vmatprep.subr.mxu0 0.0
  %1380 = vmatpush1.msra.mxu0 %v426
  %1381 = vmatprep.subr.mxu0 0.0
  %1382 = vmatpush1.msra.mxu0 %v427
  %1383 = vmatprep.subr.mxu0 0.0
  %1384 = vmatpush1.msra.mxu0 %v428
  %1385 = vmatprep.subr.mxu0 0.0
  %1386 = vmatpush1.msra.mxu0 %v429
  %1387 = vmatprep.subr.mxu0 0.0
  %1388 = vmatpush1.msra.mxu0 %v430
  %1389 = vmatprep.subr.mxu0 0.0
  %1390 = vmatpush1.msra.mxu0 %v431
  %1391 = vmatprep.subr.mxu0 0.0
  %1392 = vmatpush1.msra.mxu0 %v432
  %1393 = vmatprep.subr.mxu0 0.0
  %1394 = vmatpush1.msra.mxu0 %v433
  %1395 = vmatprep.subr.mxu0 0.0
  %1396 = vmatpush1.msra.mxu0 %v434
  %1397 = vmatprep.subr.mxu0 0.0
  %1398 = vmatpush1.msra.mxu0 %v435
  %1399 = vmatprep.subr.mxu0 0.0
  %1400 = vmatpush1.msra.mxu0 %v436
  %1401 = vmatprep.subr.mxu0 0.0
  %1402 = vmatpush1.msra.mxu0 %v437
  %1403 = vmatprep.subr.mxu0 0.0
  %1404 = vmatpush1.msra.mxu0 %v438
  %1405 = vmatprep.subr.mxu0 0.0
  %1406 = vmatpush1.msra.mxu0 %v439
  %1407 = vmatprep.subr.mxu0 0.0
  %1408 = vmatpush1.msra.mxu0 %v440
  %1409 = vmatprep.subr.mxu0 0.0
  %1410 = vmatpush1.msra.mxu0 %v441
  %1411 = vmatprep.mubr.f32.mxu0 %v49
  %1412 = vmatmul.mubr.f32.gmra.mrb[0].mxu0 %v48
  %v1413 = vpop.f32.mrb[0].mxu0
  %v1414 = vadd.f32 %v1344, %v1413
  %v1415 = vpop.f32.mrb[0].mxu0
  %1416 = vdwg.mxu0
  %1417 = vmatprep.subr.mxu0 0.0
  %1418 = vmatpush1.msra.mxu0 %v442
  %1419 = vmatprep.subr.mxu0 0.0
  %1420 = vmatpush1.msra.mxu0 %v443
  %1421 = vmatprep.subr.mxu0 0.0
  %1422 = vmatpush1.msra.mxu0 %v444
  %1423 = vmatprep.subr.mxu0 0.0
  %1424 = vmatpush1.msra.mxu0 %v445
  %1425 = vmatprep.subr.mxu0 0.0
  %1426 = vmatpush1.msra.mxu0 %v446
  %1427 = vmatprep.subr.mxu0 0.0
  %1428 = vmatpush1.msra.mxu0 %v447
  %1429 = vmatprep.subr.mxu0 0.0
  %1430 = vmatpush1.msra.mxu0 %v448
  %1431 = vmatprep.subr.mxu0 0.0
  %1432 = vmatpush1.msra.mxu0 %v449
  %1433 = vmatprep.subr.mxu0 0.0
  %1434 = vmatpush1.msra.mxu0 %v450
  %1435 = vmatprep.subr.mxu0 0.0
  %1436 = vmatpush1.msra.mxu0 %v451
  %1437 = vmatprep.subr.mxu0 0.0
  %1438 = vmatpush1.msra.mxu0 %v452
  %1439 = vmatprep.subr.mxu0 0.0
  %1440 = vmatpush1.msra.mxu0 %v453
  %1441 = vmatprep.subr.mxu0 0.0
  %1442 = vmatpush1.msra.mxu0 %v454
  %1443 = vmatprep.subr.mxu0 0.0
  %1444 = vmatpush1.msra.mxu0 %v455
  %1445 = vmatprep.subr.mxu0 0.0
  %1446 = vmatpush1.msra.mxu0 %v456
  %1447 = vmatprep.subr.mxu0 0.0
  %1448 = vmatpush1.msra.mxu0 %v457
  %1449 = vmatprep.subr.mxu0 0.0
  %1450 = vmatpush1.msra.mxu0 %v458
  %1451 = vmatprep.subr.mxu0 0.0
  %1452 = vmatpush1.msra.mxu0 %v459
  %1453 = vmatprep.subr.mxu0 0.0
  %1454 = vmatpush1.msra.mxu0 %v460
  %1455 = vmatprep.subr.mxu0 0.0
  %1456 = vmatpush1.msra.mxu0 %v461
  %1457 = vmatprep.subr.mxu0 0.0
  %1458 = vmatpush1.msra.mxu0 %v462
  %1459 = vmatprep.subr.mxu0 0.0
  %1460 = vmatpush1.msra.mxu0 %v463
  %1461 = vmatprep.subr.mxu0 0.0
  %1462 = vmatpush1.msra.mxu0 %v464
  %1463 = vmatprep.subr.mxu0 0.0
  %1464 = vmatpush1.msra.mxu0 %v465
  %1465 = vmatprep.subr.mxu0 0.0
  %1466 = vmatpush1.msra.mxu0 %v466
  %1467 = vmatprep.subr.mxu0 0.0
  %1468 = vmatpush1.msra.mxu0 %v467
  %1469 = vmatprep.subr.mxu0 0.0
  %1470 = vmatpush1.msra.mxu0 %v468
  %1471 = vmatprep.subr.mxu0 0.0
  %1472 = vmatpush1.msra.mxu0 %v469
  %1473 = vmatprep.subr.mxu0 0.0
  %1474 = vmatpush1.msra.mxu0 %v470
  %1475 = vmatprep.subr.mxu0 0.0
  %1476 = vmatpush1.msra.mxu0 %v471
  %1477 = vmatprep.subr.mxu0 0.0
  %1478 = vmatpush1.msra.mxu0 %v472
  %1479 = vmatprep.subr.mxu0 0.0
  %1480 = vmatpush1.msra.mxu0 %v473
  %1481 = vmatprep.mubr.f32.mxu0 %v51
  %1482 = vmatmul.mubr.f32.gmra.mrb[0].mxu0 %v50
  %v1483 = vpop.f32.mrb[0].mxu0
  %v1484 = vadd.f32 %v1414, %v1483
  %v1485 = vpop.f32.mrb[0].mxu0
  %1486 = vdwg.mxu0
  %1487 = vmatprep.subr.mxu0 0.0
  %1488 = vmatpush1.msra.mxu0 %v474
  %1489 = vmatprep.subr.mxu0 0.0
  %1490 = vmatpush1.msra.mxu0 %v475
  %1491 = vmatprep.subr.mxu0 0.0
  %1492 = vmatpush1.msra.mxu0 %v476
  %1493 = vmatprep.subr.mxu0 0.0
  %1494 = vmatpush1.msra.mxu0 %v477
  %1495 = vmatprep.subr.mxu0 0.0
  %1496 = vmatpush1.msra.mxu0 %v478
  %1497 = vmatprep.subr.mxu0 0.0
  %1498 = vmatpush1.msra.mxu0 %v479
  %1499 = vmatprep.subr.mxu0 0.0
  %1500 = vmatpush1.msra.mxu0 %v480
  %1501 = vmatprep.subr.mxu0 0.0
  %1502 = vmatpush1.msra.mxu0 %v481
  %1503 = vmatprep.subr.mxu0 0.0
  %1504 = vmatpush1.msra.mxu0 %v482
  %1505 = vmatprep.subr.mxu0 0.0
  %1506 = vmatpush1.msra.mxu0 %v483
  %1507 = vmatprep.subr.mxu0 0.0
  %1508 = vmatpush1.msra.mxu0 %v484
  %1509 = vmatprep.subr.mxu0 0.0
  %1510 = vmatpush1.msra.mxu0 %v485
  %1511 = vmatprep.subr.mxu0 0.0
  %1512 = vmatpush1.msra.mxu0 %v486
  %1513 = vmatprep.subr.mxu0 0.0
  %1514 = vmatpush1.msra.mxu0 %v487
  %1515 = vmatprep.subr.mxu0 0.0
  %1516 = vmatpush1.msra.mxu0 %v488
  %1517 = vmatprep.subr.mxu0 0.0
  %1518 = vmatpush1.msra.mxu0 %v489
  %1519 = vmatprep.subr.mxu0 0.0
  %1520 = vmatpush1.msra.mxu0 %v490
  %1521 = vmatprep.subr.mxu0 0.0
  %1522 = vmatpush1.msra.mxu0 %v491
  %1523 = vmatprep.subr.mxu0 0.0
  %1524 = vmatpush1.msra.mxu0 %v492
  %1525 = vmatprep.subr.mxu0 0.0
  %1526 = vmatpush1.msra.mxu0 %v493
  %1527 = vmatprep.subr.mxu0 0.0
  %1528 = vmatpush1.msra.mxu0 %v494
  %1529 = vmatprep.subr.mxu0 0.0
  %1530 = vmatpush1.msra.mxu0 %v495
  %1531 = vmatprep.subr.mxu0 0.0
  %1532 = vmatpush1.msra.mxu0 %v496
  %1533 = vmatprep.subr.mxu0 0.0
  %1534 = vmatpush1.msra.mxu0 %v497
  %1535 = vmatprep.subr.mxu0 0.0
  %1536 = vmatpush1.msra.mxu0 %v498
  %1537 = vmatprep.subr.mxu0 0.0
  %1538 = vmatpush1.msra.mxu0 %v499
  %1539 = vmatprep.subr.mxu0 0.0
  %1540 = vmatpush1.msra.mxu0 %v500
  %1541 = vmatprep.subr.mxu0 0.0
  %1542 = vmatpush1.msra.mxu0 %v501
  %1543 = vmatprep.subr.mxu0 0.0
  %1544 = vmatpush1.msra.mxu0 %v502
  %1545 = vmatprep.subr.mxu0 0.0
  %1546 = vmatpush1.msra.mxu0 %v503
  %1547 = vmatprep.subr.mxu0 0.0
  %1548 = vmatpush1.msra.mxu0 %v504
  %1549 = vmatprep.subr.mxu0 0.0
  %1550 = vmatpush1.msra.mxu0 %v505
  %1551 = vmatprep.mubr.f32.mxu0 %v53
  %1552 = vmatmul.mubr.f32.gmra.mrb[0].mxu0 %v52
  %v1553 = vpop.f32.mrb[0].mxu0
  %v1554 = vadd.f32 %v1484, %v1553
  %v1555 = vpop.f32.mrb[0].mxu0
  %1556 = vdwg.mxu0
  %1557 = vmatprep.subr.mxu0 0.0
  %1558 = vmatpush1.msra.mxu0 %v506
  %1559 = vmatprep.subr.mxu0 0.0
  %1560 = vmatpush1.msra.mxu0 %v507
  %1561 = vmatprep.subr.mxu0 0.0
  %1562 = vmatpush1.msra.mxu0 %v508
  %1563 = vmatprep.subr.mxu0 0.0
  %1564 = vmatpush1.msra.mxu0 %v509
  %1565 = vmatprep.subr.mxu0 0.0
  %1566 = vmatpush1.msra.mxu0 %v510
  %1567 = vmatprep.subr.mxu0 0.0
  %1568 = vmatpush1.msra.mxu0 %v511
  %1569 = vmatprep.subr.mxu0 0.0
  %1570 = vmatpush1.msra.mxu0 %v512
  %1571 = vmatprep.subr.mxu0 0.0
  %1572 = vmatpush1.msra.mxu0 %v513
  %1573 = vmatprep.subr.mxu0 0.0
  %1574 = vmatpush1.msra.mxu0 %v514
  %1575 = vmatprep.subr.mxu0 0.0
  %1576 = vmatpush1.msra.mxu0 %v515
  %1577 = vmatprep.subr.mxu0 0.0
  %1578 = vmatpush1.msra.mxu0 %v516
  %1579 = vmatprep.subr.mxu0 0.0
  %1580 = vmatpush1.msra.mxu0 %v517
  %1581 = vmatprep.subr.mxu0 0.0
  %1582 = vmatpush1.msra.mxu0 %v518
  %1583 = vmatprep.subr.mxu0 0.0
  %1584 = vmatpush1.msra.mxu0 %v519
  %1585 = vmatprep.subr.mxu0 0.0
  %1586 = vmatpush1.msra.mxu0 %v520
  %1587 = vmatprep.subr.mxu0 0.0
  %1588 = vmatpush1.msra.mxu0 %v521
  %1589 = vmatprep.subr.mxu0 0.0
  %1590 = vmatpush1.msra.mxu0 %v522
  %1591 = vmatprep.subr.mxu0 0.0
  %1592 = vmatpush1.msra.mxu0 %v523
  %1593 = vmatprep.subr.mxu0 0.0
  %1594 = vmatpush1.msra.mxu0 %v524
  %1595 = vmatprep.subr.mxu0 0.0
  %1596 = vmatpush1.msra.mxu0 %v525
  %1597 = vmatprep.subr.mxu0 0.0
  %1598 = vmatpush1.msra.mxu0 %v526
  %1599 = vmatprep.subr.mxu0 0.0
  %1600 = vmatpush1.msra.mxu0 %v527
  %1601 = vmatprep.subr.mxu0 0.0
  %1602 = vmatpush1.msra.mxu0 %v528
  %1603 = vmatprep.subr.mxu0 0.0
  %1604 = vmatpush1.msra.mxu0 %v529
  %1605 = vmatprep.subr.mxu0 0.0
  %1606 = vmatpush1.msra.mxu0 %v530
  %1607 = vmatprep.subr.mxu0 0.0
  %1608 = vmatpush1.msra.mxu0 %v531
  %1609 = vmatprep.subr.mxu0 0.0
  %1610 = vmatpush1.msra.mxu0 %v532
  %1611 = vmatprep.subr.mxu0 0.0
  %1612 = vmatpush1.msra.mxu0 %v533
  %1613 = vmatprep.subr.mxu0 0.0
  %1614 = vmatpush1.msra.mxu0 %v534
  %1615 = vmatprep.subr.mxu0 0.0
  %1616 = vmatpush1.msra.mxu0 %v535
  %1617 = vmatprep.subr.mxu0 0.0
  %1618 = vmatpush1.msra.mxu0 %v536
  %1619 = vmatprep.subr.mxu0 0.0
  %1620 = vmatpush1.msra.mxu0 %v537
  %1621 = vmatprep.mubr.f32.mxu0 %v55
  %1622 = vmatmul.mubr.f32.gmra.mrb[0].mxu0 %v54
  %v1623 = vpop.f32.mrb[0].mxu0
  %v1624 = vadd.f32 %v1554, %v1623
  %v1625 = vpop.f32.mrb[0].mxu0
  %1626 = vdwg.mxu0
  %1627 = vmatprep.subr.mxu0 0.0
  %1628 = vmatpush1.msra.mxu0 %v538
  %1629 = vmatprep.subr.mxu0 0.0
  %1630 = vmatpush1.msra.mxu0 %v539
  %1631 = vmatprep.subr.mxu0 0.0
  %1632 = vmatpush1.msra.mxu0 %v540
  %1633 = vmatprep.subr.mxu0 0.0
  %1634 = vmatpush1.msra.mxu0 %v541
  %1635 = vmatprep.subr.mxu0 0.0
  %1636 = vmatpush1.msra.mxu0 %v542
  %1637 = vmatprep.subr.mxu0 0.0
  %1638 = vmatpush1.msra.mxu0 %v543
  %1639 = vmatprep.subr.mxu0 0.0
  %1640 = vmatpush1.msra.mxu0 %v544
  %1641 = vmatprep.subr.mxu0 0.0
  %1642 = vmatpush1.msra.mxu0 %v545
  %1643 = vmatprep.subr.mxu0 0.0
  %1644 = vmatpush1.msra.mxu0 %v546
  %1645 = vmatprep.subr.mxu0 0.0
  %1646 = vmatpush1.msra.mxu0 %v547
  %1647 = vmatprep.subr.mxu0 0.0
  %1648 = vmatpush1.msra.mxu0 %v548
  %1649 = vmatprep.subr.mxu0 0.0
  %1650 = vmatpush1.msra.mxu0 %v549
  %1651 = vmatprep.subr.mxu0 0.0
  %1652 = vmatpush1.msra.mxu0 %v550
  %1653 = vmatprep.subr.mxu0 0.0
  %1654 = vmatpush1.msra.mxu0 %v551
  %1655 = vmatprep.subr.mxu0 0.0
  %1656 = vmatpush1.msra.mxu0 %v552
  %1657 = vmatprep.subr.mxu0 0.0
  %1658 = vmatpush1.msra.mxu0 %v553
  %1659 = vmatprep.subr.mxu0 0.0
  %1660 = vmatpush1.msra.mxu0 %v554
  %1661 = vmatprep.subr.mxu0 0.0
  %1662 = vmatpush1.msra.mxu0 %v555
  %1663 = vmatprep.subr.mxu0 0.0
  %1664 = vmatpush1.msra.mxu0 %v556
  %1665 = vmatprep.subr.mxu0 0.0
  %1666 = vmatpush1.msra.mxu0 %v557
  %1667 = vmatprep.subr.mxu0 0.0
  %1668 = vmatpush1.msra.mxu0 %v558
  %1669 = vmatprep.subr.mxu0 0.0
  %1670 = vmatpush1.msra.mxu0 %v559
  %1671 = vmatprep.subr.mxu0 0.0
  %1672 = vmatpush1.msra.mxu0 %v560
  %1673 = vmatprep.subr.mxu0 0.0
  %1674 = vmatpush1.msra.mxu0 %v561
  %1675 = vmatprep.subr.mxu0 0.0
  %1676 = vmatpush1.msra.mxu0 %v562
  %1677 = vmatprep.subr.mxu0 0.0
  %1678 = vmatpush1.msra.mxu0 %v563
  %1679 = vmatprep.subr.mxu0 0.0
  %1680 = vmatpush1.msra.mxu0 %v564
  %1681 = vmatprep.subr.mxu0 0.0
  %1682 = vmatpush1.msra.mxu0 %v565
  %1683 = vmatprep.subr.mxu0 0.0
  %1684 = vmatpush1.msra.mxu0 %v566
  %1685 = vmatprep.subr.mxu0 0.0
  %1686 = vmatpush1.msra.mxu0 %v567
  %1687 = vmatprep.subr.mxu0 0.0
  %1688 = vmatpush1.msra.mxu0 %v568
  %1689 = vmatprep.subr.mxu0 0.0
  %1690 = vmatpush1.msra.mxu0 %v569
  %1691 = vmatprep.mubr.f32.mxu0 %v57
  %1692 = vmatmul.mubr.f32.gmra.mrb[0].mxu0 %v56
  %v1693 = vpop.f32.mrb[0].mxu0
  %v1694 = vadd.f32 %v1624, %v1693
  %v1695 = vpop.f32.mrb[0].mxu0
  %1696 = vdwg.mxu0
  %v1697 = vmul.f32 %v1694, 0.2
  %v1698 = vmax.f32 %v1694, %v1697
  %v1699 = vld [vmem:[%s3] sm:$0xff]
  %v1700 = vld [vmem:[%s3 + $0x8] sm:$0xff]
  %v1701 = vld [vmem:[%s3 + $0x10] sm:$0xff]
  %v1702 = vld [vmem:[%s3 + $0x18] sm:$0xff]
  %v1703 = vld [vmem:[%s3 + $0x20] sm:$0xff]
  %v1704 = vld [vmem:[%s3 + $0x28] sm:$0xff]
  %v1705 = vld [vmem:[%s3 + $0x30] sm:$0xff]
  %v1706 = vld [vmem:[%s3 + $0x38] sm:$0xff]
  %v1707 = vld [vmem:[%s4] sm:$0x1]
  %v1709 = vlaneseq
  %v1710 = vshrl.u32 %v1709, 7
  %v1711 = vsub.s32 0, %v1710
  %v1712 = vrot.slane %v1707, %v1711
  %vm1714 = vcmask 523264
  %v1716 = vsel %vm1714, %v1698, 0
  %1718 = vmatprep.subr.mxu0 0.0
  %1719 = vmatpush1.msra.mxu0 %v1699
  %1720 = vmatprep.subr.mxu0 0.0
  %1721 = vmatpush1.msra.mxu0 %v1700
  %1722 = vmatprep.subr.mxu0 0.0
  %1723 = vmatpush1.msra.mxu0 %v1701
  %1724 = vmatprep.subr.mxu0 0.0
  %1725 = vmatpush1.msra.mxu0 %v1702
  %1726 = vmatprep.subr.mxu0 0.0
  %1727 = vmatpush1.msra.mxu0 %v1703
  %1728 = vmatprep.subr.mxu0 0.0
  %1729 = vmatpush1.msra.mxu0 %v1704
  %1730 = vmatprep.subr.mxu0 0.0
  %1731 = vmatpush1.msra.mxu0 %v1705
  %1732 = vmatprep.subr.mxu0 0.0
  %1733 = vmatpush1.msra.mxu0 %v1706
  %1734 = vmatprep.subr.mxu0 0.0
  %1735 = vmatpush1.msra.mxu0 0.0
  %1736 = vmatprep.subr.mxu0 0.0
  %1737 = vmatpush1.msra.mxu0 0.0
  %1738 = vmatprep.subr.mxu0 0.0
  %1739 = vmatpush1.msra.mxu0 0.0
  %1740 = vmatprep.subr.mxu0 0.0
  %1741 = vmatpush1.msra.mxu0 0.0
  %1742 = vmatprep.subr.mxu0 0.0
  %1743 = vmatpush1.msra.mxu0 0.0
  %1744 = vmatprep.subr.mxu0 0.0
  %1745 = vmatpush1.msra.mxu0 0.0
  %1746 = vmatprep.subr.mxu0 0.0
  %1747 = vmatpush1.msra.mxu0 0.0
  %1748 = vmatprep.subr.mxu0 0.0
  %1749 = vmatpush1.msra.mxu0 0.0
  %1750 = vmatprep.subr.mxu0 0.0
  %1751 = vmatpush1.msra.mxu0 0.0
  %1752 = vmatprep.subr.mxu0 0.0
  %1753 = vmatpush1.msra.mxu0 0.0
  %1754 = vmatprep.subr.mxu0 0.0
  %1755 = vmatpush1.msra.mxu0 0.0
  %1756 = vmatprep.subr.mxu0 0.0
  %1757 = vmatpush1.msra.mxu0 0.0
  %1758 = vmatprep.subr.mxu0 0.0
  %1759 = vmatpush1.msra.mxu0 0.0
  %1760 = vmatprep.subr.mxu0 0.0
  %1761 = vmatpush1.msra.mxu0 0.0
  %1762 = vmatprep.subr.mxu0 0.0
  %1763 = vmatpush1.msra.mxu0 0.0
  %1764 = vmatprep.subr.mxu0 0.0
  %1765 = vmatpush1.msra.mxu0 0.0
  %1766 = vmatprep.subr.mxu0 0.0
  %1767 = vmatpush1.msra.mxu0 0.0
  %1768 = vmatprep.subr.mxu0 0.0
  %1769 = vmatpush1.msra.mxu0 0.0
  %1770 = vmatprep.subr.mxu0 0.0
  %1771 = vmatpush1.msra.mxu0 0.0
  %1772 = vmatprep.subr.mxu0 0.0
  %1773 = vmatpush1.msra.mxu0 0.0
  %1774 = vmatprep.subr.mxu0 0.0
  %1775 = vmatpush1.msra.mxu0 0.0
  %1776 = vmatprep.subr.mxu0 0.0
  %1777 = vmatpush1.msra.mxu0 0.0
  %1778 = vmatprep.subr.mxu0 0.0
  %1779 = vmatpush1.msra.mxu0 0.0
  %1780 = vmatprep.subr.mxu0 0.0
  %1781 = vmatpush1.msra.mxu0 0.0
  %1782 = vmatprep.mubr.f32.mxu0 0.0
  %1783 = vmatmul.mubr.f32.gmra.mrb[0].mxu0 %v1716
  %v1784 = vpop.f32.mrb[0].mxu0
  %v1785 = vadd.f32 %v1712, %v1784
  %v1786 = vpop.f32.mrb[0].mxu0
  %1787 = vdwg.mxu0
  %v1788 = vmul.f32 %v1785, 0.2
  %v1789 = vmax.f32 %v1785, %v1788
  %v1790 = vld [vmem:[%s5] sm:$0xff]
  %v1791 = vld [vmem:[%s5 + $0x8] sm:$0xff]
  %v1792 = vld [vmem:[%s5 + $0x10] sm:$0xff]
  %v1793 = vld [vmem:[%s5 + $0x18] sm:$0xff]
  %v1794 = vld [vmem:[%s5 + $0x20] sm:$0xff]
  %v1795 = vld [vmem:[%s5 + $0x28] sm:$0xff]
  %v1796 = vld [vmem:[%s5 + $0x30] sm:$0xff]
  %v1797 = vld [vmem:[%s5 + $0x38] sm:$0xff]
  %v1798 = vld [vmem:[%s6] sm:$0x1]
  %v1800 = vlaneseq
  %v1801 = vshrl.u32 %v1800, 7
  %v1802 = vsub.s32 0, %v1801
  %v1803 = vrot.slane %v1798, %v1802
  %v1806 = vsel %vm1714, %v1789, 0
  %1808 = vmatprep.subr.mxu0 0.0
  %1809 = vmatpush1.msra.mxu0 %v1790
  %1810 = vmatprep.subr.mxu0 0.0
  %1811 = vmatpush1.msra.mxu0 %v1791
  %1812 = vmatprep.subr.mxu0 0.0
  %1813 = vmatpush1.msra.mxu0 %v1792
  %1814 = vmatprep.subr.mxu0 0.0
  %1815 = vmatpush1.msra.mxu0 %v1793
  %1816 = vmatprep.subr.mxu0 0.0
  %1817 = vmatpush1.msra.mxu0 %v1794
  %1818 = vmatprep.subr.mxu0 0.0
  %1819 = vmatpush1.msra.mxu0 %v1795
  %1820 = vmatprep.subr.mxu0 0.0
  %1821 = vmatpush1.msra.mxu0 %v1796
  %1822 = vmatprep.subr.mxu0 0.0
  %1823 = vmatpush1.msra.mxu0 %v1797
  %1824 = vmatprep.subr.mxu0 0.0
  %1825 = vmatpush1.msra.mxu0 0.0
  %1826 = vmatprep.subr.mxu0 0.0
  %1827 = vmatpush1.msra.mxu0 0.0
  %1828 = vmatprep.subr.mxu0 0.0
  %1829 = vmatpush1.msra.mxu0 0.0
  %1830 = vmatprep.subr.mxu0 0.0
  %1831 = vmatpush1.msra.mxu0 0.0
  %1832 = vmatprep.subr.mxu0 0.0
  %1833 = vmatpush1.msra.mxu0 0.0
  %1834 = vmatprep.subr.mxu0 0.0
  %1835 = vmatpush1.msra.mxu0 0.0
  %1836 = vmatprep.subr.mxu0 0.0
  %1837 = vmatpush1.msra.mxu0 0.0
  %1838 = vmatprep.subr.mxu0 0.0
  %1839 = vmatpush1.msra.mxu0 0.0
  %1840 = vmatprep.subr.mxu0 0.0
  %1841 = vmatpush1.msra.mxu0 0.0
  %1842 = vmatprep.subr.mxu0 0.0
  %1843 = vmatpush1.msra.mxu0 0.0
  %1844 = vmatprep.subr.mxu0 0.0
  %1845 = vmatpush1.msra.mxu0 0.0
  %1846 = vmatprep.subr.mxu0 0.0
  %1847 = vmatpush1.msra.mxu0 0.0
  %1848 = vmatprep.subr.mxu0 0.0
  %1849 = vmatpush1.msra.mxu0 0.0
  %1850 = vmatprep.subr.mxu0 0.0
  %1851 = vmatpush1.msra.mxu0 0.0
  %1852 = vmatprep.subr.mxu0 0.0
  %1853 = vmatpush1.msra.mxu0 0.0
  %1854 = vmatprep.subr.mxu0 0.0
  %1855 = vmatpush1.msra.mxu0 0.0
  %1856 = vmatprep.subr.mxu0 0.0
  %1857 = vmatpush1.msra.mxu0 0.0
  %1858 = vmatprep.subr.mxu0 0.0
  %1859 = vmatpush1.msra.mxu0 0.0
  %1860 = vmatprep.subr.mxu0 0.0
  %1861 = vmatpush1.msra.mxu0 0.0
  %1862 = vmatprep.subr.mxu0 0.0
  %1863 = vmatpush1.msra.mxu0 0.0
  %1864 = vmatprep.subr.mxu0 0.0
  %1865 = vmatpush1.msra.mxu0 0.0
  %1866 = vmatprep.subr.mxu0 0.0
  %1867 = vmatpush1.msra.mxu0 0.0
  %1868 = vmatprep.subr.mxu0 0.0
  %1869 = vmatpush1.msra.mxu0 0.0
  %1870 = vmatprep.subr.mxu0 0.0
  %1871 = vmatpush1.msra.mxu0 0.0
  %1872 = vmatprep.mubr.f32.mxu0 0.0
  %1873 = vmatmul.mubr.f32.gmra.mrb[0].mxu0 %v1806
  %v1874 = vpop.f32.mrb[0].mxu0
  %v1875 = vadd.f32 %v1803, %v1874
  %v1876 = vpop.f32.mrb[0].mxu0
  %1877 = vdwg.mxu0
  %1878 = vst [vmem:[%s7] sm:$0xff] %v1875
  // Predicated region
  $region30: #{classification_forward.1} parent=0 // pred_check
    _
  $region31: #{classification_forward.1} parent=0 // pred_check_branch
    %1880 = sbr.rel (0) target = $region33
  $region32: #{classification_forward.1} parent=0 // pred_region
    _
  $region33: #{classification_forward.1} parent=0 // pred_fallthru
    _
  // Predicated region
  $region34: #{classification_forward.1} parent=0 // pred_check
    _
  $region35: #{classification_forward.1} parent=0 // pred_check_branch
    %1882 = sbr.rel (0) target = $region37
  $region36: #{classification_forward.1} parent=0 // pred_region
    _
  $region37: #{classification_forward.1} parent=0 // pred_fallthru
    _

</llo_original>
